<compile_context>
chip_gen: v6e
topology: v6e:2x2x1
jax: 0.10.0
libtpu: 0.0.40
codegen_flags: <defaults>
</compile_context>

<pallas_src>
import jax
import jax.numpy as jnp
from jax.experimental import pallas as pl
from jax.experimental.pallas import tpu as pltpu


_LANE = 128

# Abramowitz-Stegun 7.1.26 erf coefficients.
_ERF_P = 0.3275911
_ERF_A1 = 0.254829592
_ERF_A2 = -0.284496736
_ERF_A3 = 1.421413741
_ERF_A4 = -1.453152027
_ERF_A5 = 1.061405429
_INV_SQRT2 = 0.7071067811865476


def _bandwise_kernel(w_ref, b_ref, g_ref, bt_ref, x_ref, o_ref):
    # w_ref:  (9, Cb)    VMEM  depthwise 3x3 taps (row-major ky*3+kx), per lane-channel
    # b_ref:  (1, Cb)    VMEM  conv bias
    # g_ref:  (1, Cb)    VMEM  BN gamma
    # bt_ref: (1, Cb)    VMEM  BN beta
    # x_ref:  (H, W, Cb) VMEM  input plane, channels on the lane axis
    # o_ref:  (H, W, Cb) VMEM  output plane
    H, W, Cb = x_ref.shape

    x = x_ref[...]                     # load the plane once
    w = w_ref[...]                     # (9, Cb) tap vectors

    # ---- depthwise 3x3 'same' conv as 9 shifted FMAs ------------------------
    # out[y, x] = sum_{ky,kx} w[ky*3+kx] * in[y+ky-1, x+kx-1]  (zeros outside)
    zrow = jnp.zeros((1, W, Cb), jnp.float32)
    zcol = jnp.zeros((H, 1, Cb), jnp.float32)

    # Hoist the two cross-sublane (W) shifts; they are shared by all 3 rows.
    cols = (
        jnp.concatenate([zcol, x[:, :-1]], axis=1),   # kx=0 -> in[:, x-1]
        x,                                            # kx=1 -> in[:, x]
        jnp.concatenate([x[:, 1:], zcol], axis=1),    # kx=2 -> in[:, x+1]
    )

    def shift_h(v, oy):                               # whole-vreg moves (cheap)
        if oy < 0:                                    # ky=0 -> in[y-1, :]
            return jnp.concatenate([zrow, v[:-1]], axis=0)
        if oy > 0:                                    # ky=2 -> in[y+1, :]
            return jnp.concatenate([v[1:], zrow], axis=0)
        return v

    acc = jnp.zeros((H, W, Cb), jnp.float32)
    for ky in range(3):
        for kx in range(3):
            tap = w[ky * 3 + kx].reshape(1, 1, Cb)
            acc = acc + shift_h(cols[kx], ky - 1) * tap
    acc = acc + b_ref[...].reshape(1, 1, Cb)

    # ---- exact GELU: 0.5 * x * (1 + erf(x / sqrt(2))) ------------------------
    z = acc * jnp.float32(_INV_SQRT2)
    az = jnp.abs(z)
    d = 1.0 + jnp.float32(_ERF_P) * az
    t = pl.reciprocal(d, approx=True)              # EUP seed (free slot)
    t = t * (2.0 - d * t)                          # one Newton step -> f32 accurate
    poly = t * (jnp.float32(_ERF_A1)
                + t * (jnp.float32(_ERF_A2)
                       + t * (jnp.float32(_ERF_A3)
                              + t * (jnp.float32(_ERF_A4)
                                     + t * jnp.float32(_ERF_A5)))))
    erf_abs = 1.0 - poly * jnp.exp(-az * az)
    erf_z = jnp.where(z >= 0.0, erf_abs, -erf_abs)
    y = acc * (0.5 + 0.5 * erf_z)

    # ---- BatchNorm2d (training, batch of 1): stats per lane-channel over HxW -
    inv_hw = jnp.float32(1.0 / (H * W))
    mean = jnp.sum(jnp.sum(y, axis=0, keepdims=True), axis=1, keepdims=True) * inv_hw
    cen = y - mean
    var = jnp.sum(jnp.sum(cen * cen, axis=0, keepdims=True),
                  axis=1, keepdims=True) * inv_hw            # biased variance
    scale = jax.lax.rsqrt(var + jnp.float32(1e-5)) * g_ref[...].reshape(1, 1, Cb)
    o_ref[...] = (cen * scale + bt_ref[...].reshape(1, 1, Cb)).astype(o_ref.dtype)


def _pick_channel_block(n_lanes, h, w):
    """Largest multiple-of-128 channel block that divides n_lanes while keeping
    the input tile around <=2 MiB (amortizes per-step overhead; double-buffered
    in+out blocks fit comfortably even in v7x's 64 MiB VMEM)."""
    k = n_lanes // _LANE
    slab_bytes = h * w * 4 * _LANE
    best = 1
    for m in range(1, k + 1):
        if k % m == 0 and m * slab_bytes <= 2 * 1024 * 1024:
            best = m
    return _LANE * best


@jax.jit
def bandwise_conv(x, wk_flat, bias, gamma, beta):
    """x: (G, C, H, W) f32; wk_flat: (C, 9); bias/gamma/beta: (C,)."""
    G, C, H, W = x.shape
    GC = G * C
    N = ((GC + _LANE - 1) // _LANE) * _LANE     # lane-pad the folded channel axis

    # Channels-last layout with the group axis folded into the channel/lane axis.
    xt = jnp.transpose(x, (2, 3, 0, 1)).reshape(H, W, GC)
    xt = jnp.pad(xt, ((0, 0), (0, 0), (0, N - GC)))

    w_lane = jnp.pad(jnp.tile(wk_flat, (G, 1)), ((0, N - GC), (0, 0))).T   # (9, N)
    b_lane = jnp.pad(jnp.tile(bias, G), (0, N - GC)).reshape(1, N)
    g_lane = jnp.pad(jnp.tile(gamma, G), (0, N - GC)).reshape(1, N)
    bt_lane = jnp.pad(jnp.tile(beta, G), (0, N - GC)).reshape(1, N)

    Cb = _pick_channel_block(N, H, W)
    block_bytes = H * W * Cb * 4
    vmem_limit = int(min(48 * 1024 * 1024, max(32 * 1024 * 1024, 16 * block_bytes)))

    cost = pl.CostEstimate(
        flops=(9 * 2 + 40) * H * W * N,          # conv FMAs + GELU/BN VPU work
        transcendentals=3 * H * W * N,           # exp + rcp + rsqrt
        bytes_accessed=2 * H * W * N * 4 + 12 * N * 4)

    out = pl.pallas_call(
        _bandwise_kernel,
        out_shape=jax.ShapeDtypeStruct((H, W, N), x.dtype),
        grid=(N // Cb,),
        in_specs=[
            pl.BlockSpec((9, Cb), lambda j: (0, j)),      # taps
            pl.BlockSpec((1, Cb), lambda j: (0, j)),      # bias
            pl.BlockSpec((1, Cb), lambda j: (0, j)),      # gamma
            pl.BlockSpec((1, Cb), lambda j: (0, j)),      # beta
            pl.BlockSpec((H, W, Cb), lambda j: (0, 0, j)),
        ],
        out_specs=pl.BlockSpec((H, W, Cb), lambda j: (0, 0, j)),
        compiler_params=pltpu.CompilerParams(
            dimension_semantics=("parallel",),
            vmem_limit_bytes=vmem_limit),
        cost_estimate=cost,
    )(w_lane, b_lane, g_lane, bt_lane, xt)

    out = out[:, :, :GC].reshape(H, W, G, C)
    return jnp.transpose(out, (2, 3, 0, 1))


def _reference(x, wk_flat, bias, gamma, beta):
    """Pure-JAX reference of the PyTorch forward (for sanity checking)."""
    G, C, H, W = x.shape
    w = wk_flat.reshape(C, 1, 3, 3)
    y = jax.lax.conv_general_dilated(
        x, w, window_strides=(1, 1), padding="SAME",
        dimension_numbers=("NCHW", "OIHW", "NCHW"),
        feature_group_count=C)
    y = y + bias[None, :, None, None]
    y = 0.5 * y * (1.0 + jax.scipy.special.erf(y / jnp.sqrt(2.0).astype(y.dtype)))
    mean = jnp.mean(y, axis=(2, 3), keepdims=True)
    var = jnp.mean((y - mean) ** 2, axis=(2, 3), keepdims=True)
    yhat = (y - mean) * jax.lax.rsqrt(var + 1e-5)
    return yhat * gamma[None, :, None, None] + beta[None, :, None, None]


if __name__ == "__main__":
    G, C, H, W = 2, 4, 16, 16

    key = jax.random.PRNGKey(0)
    kx, kw, kb = jax.random.split(key, 3)

    x = jax.random.normal(kx, (G, C, H, W), dtype=jnp.float32)

    # Deterministic parameter init (PyTorch Conv2d default: U(-1/sqrt(fan_in), +)),
    # fan_in = 1*3*3 = 9 for the depthwise conv.
    bound = 1.0 / 3.0
    wk_flat = jax.random.uniform(kw, (C, 9), dtype=jnp.float32,
                                 minval=-bound, maxval=bound)
    bias = jax.random.uniform(kb, (C,), dtype=jnp.float32,
                              minval=-bound, maxval=bound)
    gamma = jnp.ones((C,), dtype=jnp.float32)    # BatchNorm2d weight init
    beta = jnp.zeros((C,), dtype=jnp.float32)    # BatchNorm2d bias init

    out = jax.block_until_ready(bandwise_conv(x, wk_flat, bias, gamma, beta))
    ref = jax.block_until_ready(_reference(x, wk_flat, bias, gamma, beta))

    assert out.shape == x.shape and out.dtype == x.dtype
    err = float(jnp.max(jnp.abs(out - ref)))
    assert err < 1e-3, f"mismatch vs reference: {err}"

    print("KERNEL_OK")
</pallas_src>

<mosaic_0001>
module attributes {stable_mosaic.version = 11 : i64} {
  func.func @_bandwise_kernel(%arg0: i32, %arg1: memref<9x128xf32, #tpu.memory_space<vmem>>, %arg2: memref<1x128xf32, #tpu.memory_space<vmem>>, %arg3: memref<1x128xf32, #tpu.memory_space<vmem>>, %arg4: memref<1x128xf32, #tpu.memory_space<vmem>>, %arg5: memref<16x16x128xf32, #tpu.memory_space<vmem>>, %arg6: memref<16x16x128xf32, #tpu.memory_space<vmem>>) attributes {dimension_semantics = [#tpu.dimension_semantics<parallel>], iteration_bounds = array<i64: 1>, scalar_prefetch = 0 : i64, scratch_operands = 0 : i64, tpu.core_type = #tpu.core_type<tc>, window_params = [{transform_indices = @transform_0, window_bounds = array<i64: 9, 128>}, {transform_indices = @transform_1, window_bounds = array<i64: 1, 128>}, {transform_indices = @transform_2, window_bounds = array<i64: 1, 128>}, {transform_indices = @transform_3, window_bounds = array<i64: 1, 128>}, {transform_indices = @transform_4, window_bounds = array<i64: 16, 16, 128>}, {transform_indices = @transform_5, window_bounds = array<i64: 16, 16, 128>}]} {
    %c0 = arith.constant 0 : index
    %c0_0 = arith.constant 0 : index
    %c0_1 = arith.constant 0 : index
    %0 = vector.load %arg5[%c0, %c0_0, %c0_1] : memref<16x16x128xf32, #tpu.memory_space<vmem>>, vector<16x16x128xf32>
    %c0_2 = arith.constant 0 : index
    %c0_3 = arith.constant 0 : index
    %1 = vector.load %arg1[%c0_2, %c0_3] : memref<9x128xf32, #tpu.memory_space<vmem>>, vector<9x128xf32>
    %cst = arith.constant 0.000000e+00 : f32
    %2 = vector.broadcast %cst : f32 to vector<1x16x128xf32>
    %cst_4 = arith.constant 0.000000e+00 : f32
    %3 = vector.broadcast %cst_4 : f32 to vector<16x1x128xf32>
    %4 = vector.extract_strided_slice %0 {offsets = [0, 0, 0], sizes = [16, 15, 128], strides = [1, 1, 1]} : vector<16x16x128xf32> to vector<16x15x128xf32>
    %5 = tpu.concatenate %3, %4 in 1 : vector<16x1x128xf32>, vector<16x15x128xf32> -> vector<16x16x128xf32>
    %6 = vector.extract_strided_slice %0 {offsets = [0, 1, 0], sizes = [16, 15, 128], strides = [1, 1, 1]} : vector<16x16x128xf32> to vector<16x15x128xf32>
    %7 = tpu.concatenate %6, %3 in 1 : vector<16x15x128xf32>, vector<16x1x128xf32> -> vector<16x16x128xf32>
    %cst_5 = arith.constant 0.000000e+00 : f32
    %8 = vector.broadcast %cst_5 : f32 to vector<16x16x128xf32>
    %9 = vector.extract_strided_slice %1 {offsets = [0, 0], sizes = [1, 128], strides = [1, 1]} : vector<9x128xf32> to vector<1x128xf32>
    %10 = vector.shape_cast %9 : vector<1x128xf32> to vector<128xf32>
    %11 = vector.shape_cast %10 : vector<128xf32> to vector<1x1x128xf32>
    %12 = vector.extract_strided_slice %5 {offsets = [0, 0, 0], sizes = [15, 16, 128], strides = [1, 1, 1]} : vector<16x16x128xf32> to vector<15x16x128xf32>
    %13 = tpu.concatenate %2, %12 in 0 : vector<1x16x128xf32>, vector<15x16x128xf32> -> vector<16x16x128xf32>
    %14 = vector.broadcast %11 : vector<1x1x128xf32> to vector<16x16x128xf32>
    %15 = arith.mulf %13, %14 : vector<16x16x128xf32>
    %16 = arith.addf %8, %15 : vector<16x16x128xf32>
    %17 = vector.extract_strided_slice %1 {offsets = [1, 0], sizes = [1, 128], strides = [1, 1]} : vector<9x128xf32> to vector<1x128xf32>
    %18 = vector.shape_cast %17 : vector<1x128xf32> to vector<128xf32>
    %19 = vector.shape_cast %18 : vector<128xf32> to vector<1x1x128xf32>
    %20 = vector.extract_strided_slice %0 {offsets = [0, 0, 0], sizes = [15, 16, 128], strides = [1, 1, 1]} : vector<16x16x128xf32> to vector<15x16x128xf32>
    %21 = tpu.concatenate %2, %20 in 0 : vector<1x16x128xf32>, vector<15x16x128xf32> -> vector<16x16x128xf32>
    %22 = vector.broadcast %19 : vector<1x1x128xf32> to vector<16x16x128xf32>
    %23 = arith.mulf %21, %22 : vector<16x16x128xf32>
    %24 = arith.addf %16, %23 : vector<16x16x128xf32>
    %25 = vector.extract_strided_slice %1 {offsets = [2, 0], sizes = [1, 128], strides = [1, 1]} : vector<9x128xf32> to vector<1x128xf32>
    %26 = vector.shape_cast %25 : vector<1x128xf32> to vector<128xf32>
    %27 = vector.shape_cast %26 : vector<128xf32> to vector<1x1x128xf32>
    %28 = vector.extract_strided_slice %7 {offsets = [0, 0, 0], sizes = [15, 16, 128], strides = [1, 1, 1]} : vector<16x16x128xf32> to vector<15x16x128xf32>
    %29 = tpu.concatenate %2, %28 in 0 : vector<1x16x128xf32>, vector<15x16x128xf32> -> vector<16x16x128xf32>
    %30 = vector.broadcast %27 : vector<1x1x128xf32> to vector<16x16x128xf32>
    %31 = arith.mulf %29, %30 : vector<16x16x128xf32>
    %32 = arith.addf %24, %31 : vector<16x16x128xf32>
    %33 = vector.extract_strided_slice %1 {offsets = [3, 0], sizes = [1, 128], strides = [1, 1]} : vector<9x128xf32> to vector<1x128xf32>
    %34 = vector.shape_cast %33 : vector<1x128xf32> to vector<128xf32>
    %35 = vector.shape_cast %34 : vector<128xf32> to vector<1x1x128xf32>
    %36 = vector.broadcast %35 : vector<1x1x128xf32> to vector<16x16x128xf32>
    %37 = arith.mulf %5, %36 : vector<16x16x128xf32>
    %38 = arith.addf %32, %37 : vector<16x16x128xf32>
    %39 = vector.extract_strided_slice %1 {offsets = [4, 0], sizes = [1, 128], strides = [1, 1]} : vector<9x128xf32> to vector<1x128xf32>
    %40 = vector.shape_cast %39 : vector<1x128xf32> to vector<128xf32>
    %41 = vector.shape_cast %40 : vector<128xf32> to vector<1x1x128xf32>
    %42 = vector.broadcast %41 : vector<1x1x128xf32> to vector<16x16x128xf32>
    %43 = arith.mulf %0, %42 : vector<16x16x128xf32>
    %44 = arith.addf %38, %43 : vector<16x16x128xf32>
    %45 = vector.extract_strided_slice %1 {offsets = [5, 0], sizes = [1, 128], strides = [1, 1]} : vector<9x128xf32> to vector<1x128xf32>
    %46 = vector.shape_cast %45 : vector<1x128xf32> to vector<128xf32>
    %47 = vector.shape_cast %46 : vector<128xf32> to vector<1x1x128xf32>
    %48 = vector.broadcast %47 : vector<1x1x128xf32> to vector<16x16x128xf32>
    %49 = arith.mulf %7, %48 : vector<16x16x128xf32>
    %50 = arith.addf %44, %49 : vector<16x16x128xf32>
    %51 = vector.extract_strided_slice %1 {offsets = [6, 0], sizes = [1, 128], strides = [1, 1]} : vector<9x128xf32> to vector<1x128xf32>
    %52 = vector.shape_cast %51 : vector<1x128xf32> to vector<128xf32>
    %53 = vector.shape_cast %52 : vector<128xf32> to vector<1x1x128xf32>
    %54 = vector.extract_strided_slice %5 {offsets = [1, 0, 0], sizes = [15, 16, 128], strides = [1, 1, 1]} : vector<16x16x128xf32> to vector<15x16x128xf32>
    %55 = tpu.concatenate %54, %2 in 0 : vector<15x16x128xf32>, vector<1x16x128xf32> -> vector<16x16x128xf32>
    %56 = vector.broadcast %53 : vector<1x1x128xf32> to vector<16x16x128xf32>
    %57 = arith.mulf %55, %56 : vector<16x16x128xf32>
    %58 = arith.addf %50, %57 : vector<16x16x128xf32>
    %59 = vector.extract_strided_slice %1 {offsets = [7, 0], sizes = [1, 128], strides = [1, 1]} : vector<9x128xf32> to vector<1x128xf32>
    %60 = vector.shape_cast %59 : vector<1x128xf32> to vector<128xf32>
    %61 = vector.shape_cast %60 : vector<128xf32> to vector<1x1x128xf32>
    %62 = vector.extract_strided_slice %0 {offsets = [1, 0, 0], sizes = [15, 16, 128], strides = [1, 1, 1]} : vector<16x16x128xf32> to vector<15x16x128xf32>
    %63 = tpu.concatenate %62, %2 in 0 : vector<15x16x128xf32>, vector<1x16x128xf32> -> vector<16x16x128xf32>
    %64 = vector.broadcast %61 : vector<1x1x128xf32> to vector<16x16x128xf32>
    %65 = arith.mulf %63, %64 : vector<16x16x128xf32>
    %66 = arith.addf %58, %65 : vector<16x16x128xf32>
    %67 = vector.extract_strided_slice %1 {offsets = [8, 0], sizes = [1, 128], strides = [1, 1]} : vector<9x128xf32> to vector<1x128xf32>
    %68 = vector.shape_cast %67 : vector<1x128xf32> to vector<128xf32>
    %69 = vector.shape_cast %68 : vector<128xf32> to vector<1x1x128xf32>
    %70 = vector.extract_strided_slice %7 {offsets = [1, 0, 0], sizes = [15, 16, 128], strides = [1, 1, 1]} : vector<16x16x128xf32> to vector<15x16x128xf32>
    %71 = tpu.concatenate %70, %2 in 0 : vector<15x16x128xf32>, vector<1x16x128xf32> -> vector<16x16x128xf32>
    %72 = vector.broadcast %69 : vector<1x1x128xf32> to vector<16x16x128xf32>
    %73 = arith.mulf %71, %72 : vector<16x16x128xf32>
    %74 = arith.addf %66, %73 : vector<16x16x128xf32>
    %c0_6 = arith.constant 0 : index
    %c0_7 = arith.constant 0 : index
    %75 = vector.load %arg2[%c0_6, %c0_7] : memref<1x128xf32, #tpu.memory_space<vmem>>, vector<1x128xf32>
    %76 = vector.shape_cast %75 : vector<1x128xf32> to vector<1x1x128xf32>
    %77 = vector.broadcast %76 : vector<1x1x128xf32> to vector<16x16x128xf32>
    %78 = arith.addf %74, %77 : vector<16x16x128xf32>
    %cst_8 = arith.constant 0.707106769 : f32
    %79 = vector.broadcast %cst_8 : f32 to vector<16x16x128xf32>
    %80 = arith.mulf %78, %79 : vector<16x16x128xf32>
    %81 = math.absf %80 : vector<16x16x128xf32>
    %cst_9 = arith.constant 0.327591091 : f32
    %82 = vector.broadcast %cst_9 : f32 to vector<16x16x128xf32>
    %83 = arith.mulf %82, %81 : vector<16x16x128xf32>
    %cst_10 = arith.constant 1.000000e+00 : f32
    %84 = vector.broadcast %cst_10 : f32 to vector<16x16x128xf32>
    %85 = arith.addf %84, %83 : vector<16x16x128xf32>
    %86 = tpu.reciprocal %85 {approx = true} : vector<16x16x128xf32> -> vector<16x16x128xf32>
    %87 = arith.mulf %85, %86 : vector<16x16x128xf32>
    %cst_11 = arith.constant 2.000000e+00 : f32
    %88 = vector.broadcast %cst_11 : f32 to vector<16x16x128xf32>
    %89 = arith.subf %88, %87 : vector<16x16x128xf32>
    %90 = arith.mulf %86, %89 : vector<16x16x128xf32>
    %cst_12 = arith.constant 1.06140542 : f32
    %91 = vector.broadcast %cst_12 : f32 to vector<16x16x128xf32>
    %92 = arith.mulf %90, %91 : vector<16x16x128xf32>
    %cst_13 = arith.constant -1.45315206 : f32
    %93 = vector.broadcast %cst_13 : f32 to vector<16x16x128xf32>
    %94 = arith.addf %93, %92 : vector<16x16x128xf32>
    %95 = arith.mulf %90, %94 : vector<16x16x128xf32>
    %cst_14 = arith.constant 1.42141378 : f32
    %96 = vector.broadcast %cst_14 : f32 to vector<16x16x128xf32>
    %97 = arith.addf %96, %95 : vector<16x16x128xf32>
    %98 = arith.mulf %90, %97 : vector<16x16x128xf32>
    %cst_15 = arith.constant -0.284496725 : f32
    %99 = vector.broadcast %cst_15 : f32 to vector<16x16x128xf32>
    %100 = arith.addf %99, %98 : vector<16x16x128xf32>
    %101 = arith.mulf %90, %100 : vector<16x16x128xf32>
    %cst_16 = arith.constant 0.254829586 : f32
    %102 = vector.broadcast %cst_16 : f32 to vector<16x16x128xf32>
    %103 = arith.addf %102, %101 : vector<16x16x128xf32>
    %104 = arith.mulf %90, %103 : vector<16x16x128xf32>
    %cst_17 = arith.constant 0.000000e+00 : f32
    %105 = vector.broadcast %cst_17 : f32 to vector<16x16x128xf32>
    %106 = arith.subf %105, %81 : vector<16x16x128xf32>
    %107 = arith.mulf %106, %81 : vector<16x16x128xf32>
    %108 = math.exp %107 : vector<16x16x128xf32>
    %109 = arith.mulf %104, %108 : vector<16x16x128xf32>
    %cst_18 = arith.constant 1.000000e+00 : f32
    %110 = vector.broadcast %cst_18 : f32 to vector<16x16x128xf32>
    %111 = arith.subf %110, %109 : vector<16x16x128xf32>
    %cst_19 = arith.constant 0.000000e+00 : f32
    %112 = vector.broadcast %cst_19 : f32 to vector<16x16x128xf32>
    %113 = arith.cmpf oge, %80, %112 : vector<16x16x128xf32>
    %cst_20 = arith.constant 0.000000e+00 : f32
    %114 = vector.broadcast %cst_20 : f32 to vector<16x16x128xf32>
    %115 = arith.subf %114, %111 : vector<16x16x128xf32>
    %116 = arith.select %113, %111, %115 : vector<16x16x128xi1>, vector<16x16x128xf32>
    %cst_21 = arith.constant 5.000000e-01 : f32
    %117 = vector.broadcast %cst_21 : f32 to vector<16x16x128xf32>
    %118 = arith.mulf %117, %116 : vector<16x16x128xf32>
    %cst_22 = arith.constant 5.000000e-01 : f32
    %119 = vector.broadcast %cst_22 : f32 to vector<16x16x128xf32>
    %120 = arith.addf %119, %118 : vector<16x16x128xf32>
    %121 = arith.mulf %78, %120 : vector<16x16x128xf32>
    %cst_23 = arith.constant dense<0.000000e+00> : vector<16x128xf32>
    %122 = vector.multi_reduction <add>, %121, %cst_23 [0] : vector<16x16x128xf32> to vector<16x128xf32>
    %123 = vector.shape_cast %122 : vector<16x128xf32> to vector<1x16x128xf32>
    %cst_24 = arith.constant dense<0.000000e+00> : vector<1x128xf32>
    %124 = vector.multi_reduction <add>, %123, %cst_24 [1] : vector<1x16x128xf32> to vector<1x128xf32>
    %125 = vector.shape_cast %124 : vector<1x128xf32> to vector<1x1x128xf32>
    %cst_25 = arith.constant 3.906250e-03 : f32
    %126 = vector.broadcast %cst_25 : f32 to vector<1x1x128xf32>
    %127 = arith.mulf %125, %126 : vector<1x1x128xf32>
    %128 = vector.broadcast %127 : vector<1x1x128xf32> to vector<16x16x128xf32>
    %129 = arith.subf %121, %128 : vector<16x16x128xf32>
    %130 = arith.mulf %129, %129 : vector<16x16x128xf32>
    %cst_26 = arith.constant dense<0.000000e+00> : vector<16x128xf32>
    %131 = vector.multi_reduction <add>, %130, %cst_26 [0] : vector<16x16x128xf32> to vector<16x128xf32>
    %132 = vector.shape_cast %131 : vector<16x128xf32> to vector<1x16x128xf32>
    %cst_27 = arith.constant dense<0.000000e+00> : vector<1x128xf32>
    %133 = vector.multi_reduction <add>, %132, %cst_27 [1] : vector<1x16x128xf32> to vector<1x128xf32>
    %134 = vector.shape_cast %133 : vector<1x128xf32> to vector<1x1x128xf32>
    %cst_28 = arith.constant 3.906250e-03 : f32
    %135 = vector.broadcast %cst_28 : f32 to vector<1x1x128xf32>
    %136 = arith.mulf %134, %135 : vector<1x1x128xf32>
    %cst_29 = arith.constant 9.99999974E-6 : f32
    %137 = vector.broadcast %cst_29 : f32 to vector<1x1x128xf32>
    %138 = arith.addf %136, %137 : vector<1x1x128xf32>
    %139 = math.rsqrt %138 : vector<1x1x128xf32>
    %c0_30 = arith.constant 0 : index
    %c0_31 = arith.constant 0 : index
    %140 = vector.load %arg3[%c0_30, %c0_31] : memref<1x128xf32, #tpu.memory_space<vmem>>, vector<1x128xf32>
    %141 = vector.shape_cast %140 : vector<1x128xf32> to vector<1x1x128xf32>
    %142 = arith.mulf %139, %141 : vector<1x1x128xf32>
    %143 = vector.broadcast %142 : vector<1x1x128xf32> to vector<16x16x128xf32>
    %144 = arith.mulf %129, %143 : vector<16x16x128xf32>
    %c0_32 = arith.constant 0 : index
    %c0_33 = arith.constant 0 : index
    %145 = vector.load %arg4[%c0_32, %c0_33] : memref<1x128xf32, #tpu.memory_space<vmem>>, vector<1x128xf32>
    %146 = vector.shape_cast %145 : vector<1x128xf32> to vector<1x1x128xf32>
    %147 = vector.broadcast %146 : vector<1x1x128xf32> to vector<16x16x128xf32>
    %148 = arith.addf %144, %147 : vector<16x16x128xf32>
    %c0_34 = arith.constant 0 : index
    %c0_35 = arith.constant 0 : index
    %c0_36 = arith.constant 0 : index
    %149 = vector.load %arg6[%c0_34, %c0_35, %c0_36] : memref<16x16x128xf32, #tpu.memory_space<vmem>>, vector<16x16x128xf32>
    tpu.vector_store %arg6[%c0_34, %c0_35, %c0_36], %148 {strides = array<i32>} : memref<16x16x128xf32, #tpu.memory_space<vmem>>, vector<16x16x128xf32>,
    return
  }
  func.func @transform_0(%arg0: i32) -> (i32, i32) {
    %c0_i32 = arith.constant 0 : i32
    %c0_i32_0 = arith.constant 0 : i32
    return %c0_i32, %arg0 : i32, i32
  }
  func.func @transform_1(%arg0: i32) -> (i32, i32) {
    %c0_i32 = arith.constant 0 : i32
    %c0_i32_0 = arith.constant 0 : i32
    return %c0_i32, %arg0 : i32, i32
  }
  func.func @transform_2(%arg0: i32) -> (i32, i32) {
    %c0_i32 = arith.constant 0 : i32
    %c0_i32_0 = arith.constant 0 : i32
    return %c0_i32, %arg0 : i32, i32
  }
  func.func @transform_3(%arg0: i32) -> (i32, i32) {
    %c0_i32 = arith.constant 0 : i32
    %c0_i32_0 = arith.constant 0 : i32
    return %c0_i32, %arg0 : i32, i32
  }
  func.func @transform_4(%arg0: i32) -> (i32, i32, i32) {
    %c0_i32 = arith.constant 0 : i32
    %c0_i32_0 = arith.constant 0 : i32
    %c0_i32_1 = arith.constant 0 : i32
    return %c0_i32, %c0_i32_0, %arg0 : i32, i32, i32
  }
  func.func @transform_5(%arg0: i32) -> (i32, i32, i32) {
    %c0_i32 = arith.constant 0 : i32
    %c0_i32_0 = arith.constant 0 : i32
    %c0_i32_1 = arith.constant 0 : i32
    return %c0_i32, %c0_i32_0, %arg0 : i32, i32, i32
  }
}

</mosaic_0001>

<llo_original>
// kernel: tile.28
$region0: #{tile.28}
  #allocation0 [shape = 's32[1]{0}', space=sflag, size = 0x4, scoped, tag = 'scoped memory for tile.28']
  %s0 = inlined_call_operand.vmem [shape: f32[4], index: 0, kind: input, shape index: {}]
  %s1 = inlined_call_operand.vmem [shape: f32[2,4], index: 1, kind: output, shape index: {}]
  // Predicated region
  $region2: #{tile.28} parent=0 // pred_check
    _
  $region3: #{tile.28} parent=0 // pred_check_branch
    %3 = sbr.rel (0) target = $region5
  $region4: #{tile.28} parent=0 // pred_region
    _
  $region5: #{tile.28} parent=0 // pred_fallthru
    _
  %v4 = vld [vmem:[%s0] ss:$0 sm:$0xff]
  %5 = vst [vmem:[%s1] sm:$0x3] %v4

// kernel: tile.29
$region0: #{tile.29}
  %s0 = inlined_call_operand.vmem [shape: f32[2,4], index: 0, kind: input, shape index: {}]
  %s1 = inlined_call_operand.vmem [shape: f32[8], index: 1, kind: output, shape index: {}]
  $region1: #{tile.29} parent=0
    #allocation0 [shape = 'u8[4096]{0}', space=vmem, size = 0x1000, scoped, tag = 'scoped mem for output reshape']
    #allocation1 [shape = 'u8[4096]{0}', space=vmem, size = 0x1000, scoped, tag = 'scoped mem for input reshape']
    %s3 = sshll.u32 1, 2
    %s4 = ssub.s32 %s3, 1
    %v5 = vld [vmem:[%s0] sm:%s4]
    %6 = vst [vmem:[#allocation1] sm:%s4] %v5
    %v7 = vld [vmem:[#allocation1] sm:$0x1]
    %vm8 = vcmask 31744
    %9 = vst.msk [vmem:[#allocation0] sm:$0x1] %vm8, %v7
    %s10 = scalar_lea.vmem [#allocation1], 1
    %v11 = vld [vmem:[%s10] sm:$0x1]
    %12 = vrot.lane.b32.xlu0 %v11, 4
    %v13 = vpop.permute.xlu0 %12
    %vm14 = vcmask 64544
    %15 = vst.msk [vmem:[#allocation0] sm:$0x1] %vm14, %v13
    %s17 = sshll.u32 1, 1
    %s18 = ssub.s32 %s17, 1
    %v20 = vld [vmem:[#allocation0] sm:%s18]
    %s21 = sshll.u32 1, 1
    %s22 = ssub.s32 %s21, 1
    %23 = vst [vmem:[%s1] sm:%s22] %v20

// kernel: bandwise_conv.1
$region0: #{bandwise_conv.1}
  #allocation0 [shape = 'u32[]', space=smem, size = 0x4, offset = 0x4, fixed_abs, tag = 'smem constant byte address 0x4 - core index']
  #allocation1 [shape = 'u32[144,128]{1,0:T(1,128)}', space=vmem, size = 0x12000, scoped, tag = 'internal scratch']
  %s0 = inlined_call_operand.vmem [shape: f32[9,128], index: 0, kind: input, shape index: {}]
  %s1 = inlined_call_operand.vmem [shape: f32[1,128], index: 1, kind: input, shape index: {}]
  %s2 = inlined_call_operand.vmem [shape: f32[1,128], index: 2, kind: input, shape index: {}]
  %s3 = inlined_call_operand.vmem [shape: f32[1,128], index: 3, kind: input, shape index: {}]
  %s4 = inlined_call_operand.vmem [shape: f32[16,16,128], index: 4, kind: input, shape index: {}]
  %s5 = inlined_call_operand.vmem [shape: f32[16,16,128], index: 5, kind: output, shape index: {}]
  %s6 = sld [smem:[#allocation0]]
  $region30: #{bandwise_conv.1} parent=0
    _
  %s8 = ssub.s32 1, %s6
  %s9 = scalar_select 0, %s8, %s6
  // Predicated region
  $region2: #{bandwise_conv.1} parent=0 // pred_check
    _
  $region3: #{bandwise_conv.1} parent=0 // pred_check_branch
    %11 = sbr.rel (0) target = $region5
  $region4: #{bandwise_conv.1} parent=0 // pred_region
    _
  $region5: #{bandwise_conv.1} parent=0 // pred_fallthru
    _
  // Predicated region
  $region6: #{bandwise_conv.1} parent=0 // pred_check
    _
  $region7: #{bandwise_conv.1} parent=0 // pred_check_branch
    %13 = sbr.rel (0) target = $region9
  $region8: #{bandwise_conv.1} parent=0 // pred_region
    _
  $region9: #{bandwise_conv.1} parent=0 // pred_fallthru
    _
  // Predicated region
  $region10: #{bandwise_conv.1} parent=0 // pred_check
    _
  $region11: #{bandwise_conv.1} parent=0 // pred_check_branch
    %15 = sbr.rel (0) target = $region13
  $region12: #{bandwise_conv.1} parent=0 // pred_region
    _
  $region13: #{bandwise_conv.1} parent=0 // pred_fallthru
    _
  // Predicated region
  $region14: #{bandwise_conv.1} parent=0 // pred_check
    _
  $region15: #{bandwise_conv.1} parent=0 // pred_check_branch
    %17 = sbr.rel (0) target = $region17
  $region16: #{bandwise_conv.1} parent=0 // pred_region
    _
  $region17: #{bandwise_conv.1} parent=0 // pred_fallthru
    _
  // Predicated region
  $region18: #{bandwise_conv.1} parent=0 // pred_check
    _
  $region19: #{bandwise_conv.1} parent=0 // pred_check_branch
    %19 = sbr.rel (0) target = $region21
  $region20: #{bandwise_conv.1} parent=0 // pred_region
    _
  $region21: #{bandwise_conv.1} parent=0 // pred_fallthru
    _
  %v20 = vld [vmem:[%s4] sm:$0xff]
  %v21 = vld [vmem:[%s4 + $0x8] sm:$0xff]
  %v22 = vld [vmem:[%s4 + $0x10] sm:$0xff]
  %v23 = vld [vmem:[%s4 + $0x18] sm:$0xff]
  %v24 = vld [vmem:[%s4 + $0x20] sm:$0xff]
  %v25 = vld [vmem:[%s4 + $0x28] sm:$0xff]
  %v26 = vld [vmem:[%s4 + $0x30] sm:$0xff]
  %v27 = vld [vmem:[%s4 + $0x38] sm:$0xff]
  %v28 = vld [vmem:[%s4 + $0x40] sm:$0xff]
  %v29 = vld [vmem:[%s4 + $0x48] sm:$0xff]
  %v30 = vld [vmem:[%s4 + $0x50] sm:$0xff]
  %v31 = vld [vmem:[%s4 + $0x58] sm:$0xff]
  %v32 = vld [vmem:[%s4 + $0x60] sm:$0xff]
  %v33 = vld [vmem:[%s4 + $0x68] sm:$0xff]
  %v34 = vld [vmem:[%s4 + $0x70] sm:$0xff]
  %v35 = vld [vmem:[%s4 + $0x78] sm:$0xff]
  %v36 = vld [vmem:[%s4 + $0x80] sm:$0xff]
  %v37 = vld [vmem:[%s4 + $0x88] sm:$0xff]
  %v38 = vld [vmem:[%s4 + $0x90] sm:$0xff]
  %v39 = vld [vmem:[%s4 + $0x98] sm:$0xff]
  %v40 = vld [vmem:[%s4 + $0xa0] sm:$0xff]
  %v41 = vld [vmem:[%s4 + $0xa8] sm:$0xff]
  %v42 = vld [vmem:[%s4 + $0xb0] sm:$0xff]
  %v43 = vld [vmem:[%s4 + $0xb8] sm:$0xff]
  %v44 = vld [vmem:[%s4 + $0xc0] sm:$0xff]
  %v45 = vld [vmem:[%s4 + $0xc8] sm:$0xff]
  %v46 = vld [vmem:[%s4 + $0xd0] sm:$0xff]
  %v47 = vld [vmem:[%s4 + $0xd8] sm:$0xff]
  %v48 = vld [vmem:[%s4 + $0xe0] sm:$0xff]
  %v49 = vld [vmem:[%s4 + $0xe8] sm:$0xff]
  %v50 = vld [vmem:[%s4 + $0xf0] sm:$0xff]
  %v51 = vld [vmem:[%s4 + $0xf8] sm:$0xff]
  %v52 = vld [vmem:[%s0] sm:$0xff]
  %v53 = vld [vmem:[%s0 + $0x8] sm:$0x1]
  %vm86 = vcmask 1040384
  %v87 = vrot.slane %v20, 7
  %v88 = vrot.slane %v21, 7
  %v89 = vsel %vm86, %v87, %v88
  %v90 = vrot.slane %v22, 7
  %v91 = vrot.slane %v23, 7
  %v92 = vsel %vm86, %v90, %v91
  %v93 = vrot.slane %v24, 7
  %v94 = vrot.slane %v25, 7
  %v95 = vsel %vm86, %v93, %v94
  %v96 = vrot.slane %v26, 7
  %v97 = vrot.slane %v27, 7
  %v98 = vsel %vm86, %v96, %v97
  %v99 = vrot.slane %v28, 7
  %v100 = vrot.slane %v29, 7
  %v101 = vsel %vm86, %v99, %v100
  %v102 = vrot.slane %v30, 7
  %v103 = vrot.slane %v31, 7
  %v104 = vsel %vm86, %v102, %v103
  %v105 = vrot.slane %v32, 7
  %v106 = vrot.slane %v33, 7
  %v107 = vsel %vm86, %v105, %v106
  %v108 = vrot.slane %v34, 7
  %v109 = vrot.slane %v35, 7
  %v110 = vsel %vm86, %v108, %v109
  %v111 = vrot.slane %v36, 7
  %v112 = vrot.slane %v37, 7
  %v113 = vsel %vm86, %v111, %v112
  %v114 = vrot.slane %v38, 7
  %v115 = vrot.slane %v39, 7
  %v116 = vsel %vm86, %v114, %v115
  %v117 = vrot.slane %v40, 7
  %v118 = vrot.slane %v41, 7
  %v119 = vsel %vm86, %v117, %v118
  %v120 = vrot.slane %v42, 7
  %v121 = vrot.slane %v43, 7
  %v122 = vsel %vm86, %v120, %v121
  %v123 = vrot.slane %v44, 7
  %v124 = vrot.slane %v45, 7
  %v125 = vsel %vm86, %v123, %v124
  %v126 = vrot.slane %v46, 7
  %v127 = vrot.slane %v47, 7
  %v128 = vsel %vm86, %v126, %v127
  %v129 = vrot.slane %v48, 7
  %v130 = vrot.slane %v49, 7
  %v131 = vsel %vm86, %v129, %v130
  %v132 = vrot.slane %v50, 7
  %v133 = vrot.slane %v51, 7
  %v134 = vsel %vm86, %v132, %v133
  %v167 = vsel %vm86, 0.0, %v87
  %v168 = vsel %vm86, 0.0, %v90
  %v169 = vsel %vm86, 0.0, %v93
  %v170 = vsel %vm86, 0.0, %v96
  %v171 = vsel %vm86, 0.0, %v99
  %v172 = vsel %vm86, 0.0, %v102
  %v173 = vsel %vm86, 0.0, %v105
  %v174 = vsel %vm86, 0.0, %v108
  %v175 = vsel %vm86, 0.0, %v111
  %v176 = vsel %vm86, 0.0, %v114
  %v177 = vsel %vm86, 0.0, %v117
  %v178 = vsel %vm86, 0.0, %v120
  %v179 = vsel %vm86, 0.0, %v123
  %v180 = vsel %vm86, 0.0, %v126
  %v181 = vsel %vm86, 0.0, %v129
  %v182 = vsel %vm86, 0.0, %v132
  %vm183 = vcmask 1046528
  %v184 = vrot.slane %v20, 1
  %v185 = vrot.slane %v21, 1
  %v186 = vsel %vm183, %v184, %v185
  %v187 = vrot.slane %v22, 1
  %v188 = vrot.slane %v23, 1
  %v189 = vsel %vm183, %v187, %v188
  %v190 = vrot.slane %v24, 1
  %v191 = vrot.slane %v25, 1
  %v192 = vsel %vm183, %v190, %v191
  %v193 = vrot.slane %v26, 1
  %v194 = vrot.slane %v27, 1
  %v195 = vsel %vm183, %v193, %v194
  %v196 = vrot.slane %v28, 1
  %v197 = vrot.slane %v29, 1
  %v198 = vsel %vm183, %v196, %v197
  %v199 = vrot.slane %v30, 1
  %v200 = vrot.slane %v31, 1
  %v201 = vsel %vm183, %v199, %v200
  %v202 = vrot.slane %v32, 1
  %v203 = vrot.slane %v33, 1
  %v204 = vsel %vm183, %v202, %v203
  %v205 = vrot.slane %v34, 1
  %v206 = vrot.slane %v35, 1
  %v207 = vsel %vm183, %v205, %v206
  %v208 = vrot.slane %v36, 1
  %v209 = vrot.slane %v37, 1
  %v210 = vsel %vm183, %v208, %v209
  %v211 = vrot.slane %v38, 1
  %v212 = vrot.slane %v39, 1
  %v213 = vsel %vm183, %v211, %v212
  %v214 = vrot.slane %v40, 1
  %v215 = vrot.slane %v41, 1
  %v216 = vsel %vm183, %v214, %v215
  %v217 = vrot.slane %v42, 1
  %v218 = vrot.slane %v43, 1
  %v219 = vsel %vm183, %v217, %v218
  %v220 = vrot.slane %v44, 1
  %v221 = vrot.slane %v45, 1
  %v222 = vsel %vm183, %v220, %v221
  %v223 = vrot.slane %v46, 1
  %v224 = vrot.slane %v47, 1
  %v225 = vsel %vm183, %v223, %v224
  %v226 = vrot.slane %v48, 1
  %v227 = vrot.slane %v49, 1
  %v228 = vsel %vm183, %v226, %v227
  %v229 = vrot.slane %v50, 1
  %v230 = vrot.slane %v51, 1
  %v231 = vsel %vm183, %v229, %v230
  %v264 = vsel %vm183, %v185, 0.0
  %v265 = vsel %vm183, %v188, 0.0
  %v266 = vsel %vm183, %v191, 0.0
  %v267 = vsel %vm183, %v194, 0.0
  %v268 = vsel %vm183, %v197, 0.0
  %v269 = vsel %vm183, %v200, 0.0
  %v270 = vsel %vm183, %v203, 0.0
  %v271 = vsel %vm183, %v206, 0.0
  %v272 = vsel %vm183, %v209, 0.0
  %v273 = vsel %vm183, %v212, 0.0
  %v274 = vsel %vm183, %v215, 0.0
  %v275 = vsel %vm183, %v218, 0.0
  %v276 = vsel %vm183, %v221, 0.0
  %v277 = vsel %vm183, %v224, 0.0
  %v278 = vsel %vm183, %v227, 0.0
  %v279 = vsel %vm183, %v230, 0.0
  %v280 = vlaneseq
  %v281 = vshrl.u32 %v280, 7
  %v282 = vsub.s32 0, %v281
  %v283 = vrot.slane %v52, %v282
  %v284 = vmul.f32 %v283, 0.0
  %v285 = vmul.f32 %v167, %v283
  %v286 = vmul.f32 %v89, %v283
  %v287 = vmul.f32 %v168, %v283
  %v288 = vmul.f32 %v92, %v283
  %v289 = vmul.f32 %v169, %v283
  %v290 = vmul.f32 %v95, %v283
  %v291 = vmul.f32 %v170, %v283
  %v292 = vmul.f32 %v98, %v283
  %v293 = vmul.f32 %v171, %v283
  %v294 = vmul.f32 %v101, %v283
  %v295 = vmul.f32 %v172, %v283
  %v296 = vmul.f32 %v104, %v283
  %v297 = vmul.f32 %v173, %v283
  %v298 = vmul.f32 %v107, %v283
  %v299 = vmul.f32 %v174, %v283
  %v300 = vmul.f32 %v110, %v283
  %v301 = vmul.f32 %v175, %v283
  %v302 = vmul.f32 %v113, %v283
  %v303 = vmul.f32 %v176, %v283
  %v304 = vmul.f32 %v116, %v283
  %v305 = vmul.f32 %v177, %v283
  %v306 = vmul.f32 %v119, %v283
  %v307 = vmul.f32 %v178, %v283
  %v308 = vmul.f32 %v122, %v283
  %v309 = vmul.f32 %v179, %v283
  %v310 = vmul.f32 %v125, %v283
  %v311 = vmul.f32 %v180, %v283
  %v312 = vmul.f32 %v128, %v283
  %v313 = vmul.f32 %v181, %v283
  %v314 = vmul.f32 %v131, %v283
  %v315 = vadd.f32 %v284, 0.0
  %v316 = vadd.f32 %v285, 0.0
  %v317 = vadd.f32 %v286, 0.0
  %v318 = vadd.f32 %v287, 0.0
  %v319 = vadd.f32 %v288, 0.0
  %v320 = vadd.f32 %v289, 0.0
  %v321 = vadd.f32 %v290, 0.0
  %v322 = vadd.f32 %v291, 0.0
  %v323 = vadd.f32 %v292, 0.0
  %v324 = vadd.f32 %v293, 0.0
  %v325 = vadd.f32 %v294, 0.0
  %v326 = vadd.f32 %v295, 0.0
  %v327 = vadd.f32 %v296, 0.0
  %v328 = vadd.f32 %v297, 0.0
  %v329 = vadd.f32 %v298, 0.0
  %v330 = vadd.f32 %v299, 0.0
  %v331 = vadd.f32 %v300, 0.0
  %v332 = vadd.f32 %v301, 0.0
  %v333 = vadd.f32 %v302, 0.0
  %v334 = vadd.f32 %v303, 0.0
  %v335 = vadd.f32 %v304, 0.0
  %v336 = vadd.f32 %v305, 0.0
  %v337 = vadd.f32 %v306, 0.0
  %v338 = vadd.f32 %v307, 0.0
  %v339 = vadd.f32 %v308, 0.0
  %v340 = vadd.f32 %v309, 0.0
  %v341 = vadd.f32 %v310, 0.0
  %v342 = vadd.f32 %v311, 0.0
  %v343 = vadd.f32 %v312, 0.0
  %v344 = vadd.f32 %v313, 0.0
  %v345 = vadd.f32 %v314, 0.0
  %v346 = vlaneseq
  %v347 = vshrl.u32 %v346, 7
  %v348 = vsub.s32 1, %v347
  %v349 = vrot.slane %v52, %v348
  %v350 = vmul.f32 %v349, 0.0
  %v351 = vmul.f32 %v20, %v349
  %v352 = vmul.f32 %v21, %v349
  %v353 = vmul.f32 %v22, %v349
  %v354 = vmul.f32 %v23, %v349
  %v355 = vmul.f32 %v24, %v349
  %v356 = vmul.f32 %v25, %v349
  %v357 = vmul.f32 %v26, %v349
  %v358 = vmul.f32 %v27, %v349
  %v359 = vmul.f32 %v28, %v349
  %v360 = vmul.f32 %v29, %v349
  %v361 = vmul.f32 %v30, %v349
  %v362 = vmul.f32 %v31, %v349
  %v363 = vmul.f32 %v32, %v349
  %v364 = vmul.f32 %v33, %v349
  %v365 = vmul.f32 %v34, %v349
  %v366 = vmul.f32 %v35, %v349
  %v367 = vmul.f32 %v36, %v349
  %v368 = vmul.f32 %v37, %v349
  %v369 = vmul.f32 %v38, %v349
  %v370 = vmul.f32 %v39, %v349
  %v371 = vmul.f32 %v40, %v349
  %v372 = vmul.f32 %v41, %v349
  %v373 = vmul.f32 %v42, %v349
  %v374 = vmul.f32 %v43, %v349
  %v375 = vmul.f32 %v44, %v349
  %v376 = vmul.f32 %v45, %v349
  %v377 = vmul.f32 %v46, %v349
  %v378 = vmul.f32 %v47, %v349
  %v379 = vmul.f32 %v48, %v349
  %v380 = vmul.f32 %v49, %v349
  %v381 = vadd.f32 %v315, %v350
  %v382 = vadd.f32 %v316, %v351
  %v383 = vadd.f32 %v317, %v352
  %v384 = vadd.f32 %v318, %v353
  %v385 = vadd.f32 %v319, %v354
  %v386 = vadd.f32 %v320, %v355
  %v387 = vadd.f32 %v321, %v356
  %v388 = vadd.f32 %v322, %v357
  %v389 = vadd.f32 %v323, %v358
  %v390 = vadd.f32 %v324, %v359
  %v391 = vadd.f32 %v325, %v360
  %v392 = vadd.f32 %v326, %v361
  %v393 = vadd.f32 %v327, %v362
  %v394 = vadd.f32 %v328, %v363
  %v395 = vadd.f32 %v329, %v364
  %v396 = vadd.f32 %v330, %v365
  %v397 = vadd.f32 %v331, %v366
  %v398 = vadd.f32 %v332, %v367
  %v399 = vadd.f32 %v333, %v368
  %v400 = vadd.f32 %v334, %v369
  %v401 = vadd.f32 %v335, %v370
  %v402 = vadd.f32 %v336, %v371
  %v403 = vadd.f32 %v337, %v372
  %v404 = vadd.f32 %v338, %v373
  %v405 = vadd.f32 %v339, %v374
  %v406 = vadd.f32 %v340, %v375
  %v407 = vadd.f32 %v341, %v376
  %v408 = vadd.f32 %v342, %v377
  %v409 = vadd.f32 %v343, %v378
  %v410 = vadd.f32 %v344, %v379
  %v411 = vadd.f32 %v345, %v380
  %v412 = vlaneseq
  %v413 = vshrl.u32 %v412, 7
  %v414 = vsub.s32 2, %v413
  %v415 = vrot.slane %v52, %v414
  %v416 = vmul.f32 %v415, 0.0
  %v417 = vmul.f32 %v186, %v415
  %v418 = vmul.f32 %v264, %v415
  %v419 = vmul.f32 %v189, %v415
  %v420 = vmul.f32 %v265, %v415
  %v421 = vmul.f32 %v192, %v415
  %v422 = vmul.f32 %v266, %v415
  %v423 = vmul.f32 %v195, %v415
  %v424 = vmul.f32 %v267, %v415
  %v425 = vmul.f32 %v198, %v415
  %v426 = vmul.f32 %v268, %v415
  %v427 = vmul.f32 %v201, %v415
  %v428 = vmul.f32 %v269, %v415
  %v429 = vmul.f32 %v204, %v415
  %v430 = vmul.f32 %v270, %v415
  %v431 = vmul.f32 %v207, %v415
  %v432 = vmul.f32 %v271, %v415
  %v433 = vmul.f32 %v210, %v415
  %v434 = vmul.f32 %v272, %v415
  %v435 = vmul.f32 %v213, %v415
  %v436 = vmul.f32 %v273, %v415
  %v437 = vmul.f32 %v216, %v415
  %v438 = vmul.f32 %v274, %v415
  %v439 = vmul.f32 %v219, %v415
  %v440 = vmul.f32 %v275, %v415
  %v441 = vmul.f32 %v222, %v415
  %v442 = vmul.f32 %v276, %v415
  %v443 = vmul.f32 %v225, %v415
  %v444 = vmul.f32 %v277, %v415
  %v445 = vmul.f32 %v228, %v415
  %v446 = vmul.f32 %v278, %v415
  %v447 = vadd.f32 %v381, %v416
  %v448 = vadd.f32 %v382, %v417
  %v449 = vadd.f32 %v383, %v418
  %v450 = vadd.f32 %v384, %v419
  %v451 = vadd.f32 %v385, %v420
  %v452 = vadd.f32 %v386, %v421
  %v453 = vadd.f32 %v387, %v422
  %v454 = vadd.f32 %v388, %v423
  %v455 = vadd.f32 %v389, %v424
  %v456 = vadd.f32 %v390, %v425
  %v457 = vadd.f32 %v391, %v426
  %v458 = vadd.f32 %v392, %v427
  %v459 = vadd.f32 %v393, %v428
  %v460 = vadd.f32 %v394, %v429
  %v461 = vadd.f32 %v395, %v430
  %v462 = vadd.f32 %v396, %v431
  %v463 = vadd.f32 %v397, %v432
  %v464 = vadd.f32 %v398, %v433
  %v465 = vadd.f32 %v399, %v434
  %v466 = vadd.f32 %v400, %v435
  %v467 = vadd.f32 %v401, %v436
  %v468 = vadd.f32 %v402, %v437
  %v469 = vadd.f32 %v403, %v438
  %v470 = vadd.f32 %v404, %v439
  %v471 = vadd.f32 %v405, %v440
  %v472 = vadd.f32 %v406, %v441
  %v473 = vadd.f32 %v407, %v442
  %v474 = vadd.f32 %v408, %v443
  %v475 = vadd.f32 %v409, %v444
  %v476 = vadd.f32 %v410, %v445
  %v477 = vadd.f32 %v411, %v446
  %v478 = vlaneseq
  %v479 = vshrl.u32 %v478, 7
  %v480 = vsub.s32 3, %v479
  %v481 = vrot.slane %v52, %v480
  %v482 = vmul.f32 %v167, %v481
  %v483 = vmul.f32 %v89, %v481
  %v484 = vmul.f32 %v168, %v481
  %v485 = vmul.f32 %v92, %v481
  %v486 = vmul.f32 %v169, %v481
  %v487 = vmul.f32 %v95, %v481
  %v488 = vmul.f32 %v170, %v481
  %v489 = vmul.f32 %v98, %v481
  %v490 = vmul.f32 %v171, %v481
  %v491 = vmul.f32 %v101, %v481
  %v492 = vmul.f32 %v172, %v481
  %v493 = vmul.f32 %v104, %v481
  %v494 = vmul.f32 %v173, %v481
  %v495 = vmul.f32 %v107, %v481
  %v496 = vmul.f32 %v174, %v481
  %v497 = vmul.f32 %v110, %v481
  %v498 = vmul.f32 %v175, %v481
  %v499 = vmul.f32 %v113, %v481
  %v500 = vmul.f32 %v176, %v481
  %v501 = vmul.f32 %v116, %v481
  %v502 = vmul.f32 %v177, %v481
  %v503 = vmul.f32 %v119, %v481
  %v504 = vmul.f32 %v178, %v481
  %v505 = vmul.f32 %v122, %v481
  %v506 = vmul.f32 %v179, %v481
  %v507 = vmul.f32 %v125, %v481
  %v508 = vmul.f32 %v180, %v481
  %v509 = vmul.f32 %v128, %v481
  %v510 = vmul.f32 %v181, %v481
  %v511 = vmul.f32 %v131, %v481
  %v512 = vmul.f32 %v182, %v481
  %v513 = vmul.f32 %v134, %v481
  %v514 = vadd.f32 %v447, %v482
  %v515 = vadd.f32 %v447, %v483
  %v516 = vadd.f32 %v448, %v484
  %v517 = vadd.f32 %v449, %v485
  %v518 = vadd.f32 %v450, %v486
  %v519 = vadd.f32 %v451, %v487
  %v520 = vadd.f32 %v452, %v488
  %v521 = vadd.f32 %v453, %v489
  %v522 = vadd.f32 %v454, %v490
  %v523 = vadd.f32 %v455, %v491
  %v524 = vadd.f32 %v456, %v492
  %v525 = vadd.f32 %v457, %v493
  %v526 = vadd.f32 %v458, %v494
  %v527 = vadd.f32 %v459, %v495
  %v528 = vadd.f32 %v460, %v496
  %v529 = vadd.f32 %v461, %v497
  %v530 = vadd.f32 %v462, %v498
  %v531 = vadd.f32 %v463, %v499
  %v532 = vadd.f32 %v464, %v500
  %v533 = vadd.f32 %v465, %v501
  %v534 = vadd.f32 %v466, %v502
  %v535 = vadd.f32 %v467, %v503
  %v536 = vadd.f32 %v468, %v504
  %v537 = vadd.f32 %v469, %v505
  %v538 = vadd.f32 %v470, %v506
  %v539 = vadd.f32 %v471, %v507
  %v540 = vadd.f32 %v472, %v508
  %v541 = vadd.f32 %v473, %v509
  %v542 = vadd.f32 %v474, %v510
  %v543 = vadd.f32 %v475, %v511
  %v544 = vadd.f32 %v476, %v512
  %v545 = vadd.f32 %v477, %v513
  %v546 = vlaneseq
  %v547 = vshrl.u32 %v546, 7
  %v548 = vsub.s32 4, %v547
  %v549 = vrot.slane %v52, %v548
  %v550 = vmul.f32 %v20, %v549
  %v551 = vmul.f32 %v21, %v549
  %v552 = vmul.f32 %v22, %v549
  %v553 = vmul.f32 %v23, %v549
  %v554 = vmul.f32 %v24, %v549
  %v555 = vmul.f32 %v25, %v549
  %v556 = vmul.f32 %v26, %v549
  %v557 = vmul.f32 %v27, %v549
  %v558 = vmul.f32 %v28, %v549
  %v559 = vmul.f32 %v29, %v549
  %v560 = vmul.f32 %v30, %v549
  %v561 = vmul.f32 %v31, %v549
  %v562 = vmul.f32 %v32, %v549
  %v563 = vmul.f32 %v33, %v549
  %v564 = vmul.f32 %v34, %v549
  %v565 = vmul.f32 %v35, %v549
  %v566 = vmul.f32 %v36, %v549
  %v567 = vmul.f32 %v37, %v549
  %v568 = vmul.f32 %v38, %v549
  %v569 = vmul.f32 %v39, %v549
  %v570 = vmul.f32 %v40, %v549
  %v571 = vmul.f32 %v41, %v549
  %v572 = vmul.f32 %v42, %v549
  %v573 = vmul.f32 %v43, %v549
  %v574 = vmul.f32 %v44, %v549
  %v575 = vmul.f32 %v45, %v549
  %v576 = vmul.f32 %v46, %v549
  %v577 = vmul.f32 %v47, %v549
  %v578 = vmul.f32 %v48, %v549
  %v579 = vmul.f32 %v49, %v549
  %v580 = vmul.f32 %v50, %v549
  %v581 = vmul.f32 %v51, %v549
  %v582 = vadd.f32 %v514, %v550
  %v583 = vadd.f32 %v515, %v551
  %v584 = vadd.f32 %v516, %v552
  %v585 = vadd.f32 %v517, %v553
  %v586 = vadd.f32 %v518, %v554
  %v587 = vadd.f32 %v519, %v555
  %v588 = vadd.f32 %v520, %v556
  %v589 = vadd.f32 %v521, %v557
  %v590 = vadd.f32 %v522, %v558
  %v591 = vadd.f32 %v523, %v559
  %v592 = vadd.f32 %v524, %v560
  %v593 = vadd.f32 %v525, %v561
  %v594 = vadd.f32 %v526, %v562
  %v595 = vadd.f32 %v527, %v563
  %v596 = vadd.f32 %v528, %v564
  %v597 = vadd.f32 %v529, %v565
  %v598 = vadd.f32 %v530, %v566
  %v599 = vadd.f32 %v531, %v567
  %v600 = vadd.f32 %v532, %v568
  %v601 = vadd.f32 %v533, %v569
  %v602 = vadd.f32 %v534, %v570
  %v603 = vadd.f32 %v535, %v571
  %v604 = vadd.f32 %v536, %v572
  %v605 = vadd.f32 %v537, %v573
  %v606 = vadd.f32 %v538, %v574
  %v607 = vadd.f32 %v539, %v575
  %v608 = vadd.f32 %v540, %v576
  %v609 = vadd.f32 %v541, %v577
  %v610 = vadd.f32 %v542, %v578
  %v611 = vadd.f32 %v543, %v579
  %v612 = vadd.f32 %v544, %v580
  %v613 = vadd.f32 %v545, %v581
  %v614 = vlaneseq
  %v615 = vshrl.u32 %v614, 7
  %v616 = vsub.s32 5, %v615
  %v617 = vrot.slane %v52, %v616
  %v618 = vmul.f32 %v186, %v617
  %v619 = vmul.f32 %v264, %v617
  %v620 = vmul.f32 %v189, %v617
  %v621 = vmul.f32 %v265, %v617
  %v622 = vmul.f32 %v192, %v617
  %v623 = vmul.f32 %v266, %v617
  %v624 = vmul.f32 %v195, %v617
  %v625 = vmul.f32 %v267, %v617
  %v626 = vmul.f32 %v198, %v617
  %v627 = vmul.f32 %v268, %v617
  %v628 = vmul.f32 %v201, %v617
  %v629 = vmul.f32 %v269, %v617
  %v630 = vmul.f32 %v204, %v617
  %v631 = vmul.f32 %v270, %v617
  %v632 = vmul.f32 %v207, %v617
  %v633 = vmul.f32 %v271, %v617
  %v634 = vmul.f32 %v210, %v617
  %v635 = vmul.f32 %v272, %v617
  %v636 = vmul.f32 %v213, %v617
  %v637 = vmul.f32 %v273, %v617
  %v638 = vmul.f32 %v216, %v617
  %v639 = vmul.f32 %v274, %v617
  %v640 = vmul.f32 %v219, %v617
  %v641 = vmul.f32 %v275, %v617
  %v642 = vmul.f32 %v222, %v617
  %v643 = vmul.f32 %v276, %v617
  %v644 = vmul.f32 %v225, %v617
  %v645 = vmul.f32 %v277, %v617
  %v646 = vmul.f32 %v228, %v617
  %v647 = vmul.f32 %v278, %v617
  %v648 = vmul.f32 %v231, %v617
  %v649 = vmul.f32 %v279, %v617
  %v650 = vadd.f32 %v582, %v618
  %v651 = vadd.f32 %v583, %v619
  %v652 = vadd.f32 %v584, %v620
  %v653 = vadd.f32 %v585, %v621
  %v654 = vadd.f32 %v586, %v622
  %v655 = vadd.f32 %v587, %v623
  %v656 = vadd.f32 %v588, %v624
  %v657 = vadd.f32 %v589, %v625
  %v658 = vadd.f32 %v590, %v626
  %v659 = vadd.f32 %v591, %v627
  %v660 = vadd.f32 %v592, %v628
  %v661 = vadd.f32 %v593, %v629
  %v662 = vadd.f32 %v594, %v630
  %v663 = vadd.f32 %v595, %v631
  %v664 = vadd.f32 %v596, %v632
  %v665 = vadd.f32 %v597, %v633
  %v666 = vadd.f32 %v598, %v634
  %v667 = vadd.f32 %v599, %v635
  %v668 = vadd.f32 %v600, %v636
  %v669 = vadd.f32 %v601, %v637
  %v670 = vadd.f32 %v602, %v638
  %v671 = vadd.f32 %v603, %v639
  %v672 = vadd.f32 %v604, %v640
  %v673 = vadd.f32 %v605, %v641
  %v674 = vadd.f32 %v606, %v642
  %v675 = vadd.f32 %v607, %v643
  %v676 = vadd.f32 %v608, %v644
  %v677 = vadd.f32 %v609, %v645
  %v678 = vadd.f32 %v610, %v646
  %v679 = vadd.f32 %v611, %v647
  %v680 = vadd.f32 %v612, %v648
  %v681 = vadd.f32 %v613, %v649
  %v682 = vlaneseq
  %v683 = vshrl.u32 %v682, 7
  %v684 = vsub.s32 6, %v683
  %v685 = vrot.slane %v52, %v684
  %v686 = vmul.f32 %v168, %v685
  %v687 = vmul.f32 %v92, %v685
  %v688 = vmul.f32 %v169, %v685
  %v689 = vmul.f32 %v95, %v685
  %v690 = vmul.f32 %v170, %v685
  %v691 = vmul.f32 %v98, %v685
  %v692 = vmul.f32 %v171, %v685
  %v693 = vmul.f32 %v101, %v685
  %v694 = vmul.f32 %v172, %v685
  %v695 = vmul.f32 %v104, %v685
  %v696 = vmul.f32 %v173, %v685
  %v697 = vmul.f32 %v107, %v685
  %v698 = vmul.f32 %v174, %v685
  %v699 = vmul.f32 %v110, %v685
  %v700 = vmul.f32 %v175, %v685
  %v701 = vmul.f32 %v113, %v685
  %v702 = vmul.f32 %v176, %v685
  %v703 = vmul.f32 %v116, %v685
  %v704 = vmul.f32 %v177, %v685
  %v705 = vmul.f32 %v119, %v685
  %v706 = vmul.f32 %v178, %v685
  %v707 = vmul.f32 %v122, %v685
  %v708 = vmul.f32 %v179, %v685
  %v709 = vmul.f32 %v125, %v685
  %v710 = vmul.f32 %v180, %v685
  %v711 = vmul.f32 %v128, %v685
  %v712 = vmul.f32 %v181, %v685
  %v713 = vmul.f32 %v131, %v685
  %v714 = vmul.f32 %v182, %v685
  %v715 = vmul.f32 %v134, %v685
  %v716 = vmul.f32 %v685, 0.0
  %v717 = vadd.f32 %v650, %v686
  %v718 = vadd.f32 %v651, %v687
  %v719 = vadd.f32 %v652, %v688
  %v720 = vadd.f32 %v653, %v689
  %v721 = vadd.f32 %v654, %v690
  %v722 = vadd.f32 %v655, %v691
  %v723 = vadd.f32 %v656, %v692
  %v724 = vadd.f32 %v657, %v693
  %v725 = vadd.f32 %v658, %v694
  %v726 = vadd.f32 %v659, %v695
  %v727 = vadd.f32 %v660, %v696
  %v728 = vadd.f32 %v661, %v697
  %v729 = vadd.f32 %v662, %v698
  %v730 = vadd.f32 %v663, %v699
  %v731 = vadd.f32 %v664, %v700
  %v732 = vadd.f32 %v665, %v701
  %v733 = vadd.f32 %v666, %v702
  %v734 = vadd.f32 %v667, %v703
  %v735 = vadd.f32 %v668, %v704
  %v736 = vadd.f32 %v669, %v705
  %v737 = vadd.f32 %v670, %v706
  %v738 = vadd.f32 %v671, %v707
  %v739 = vadd.f32 %v672, %v708
  %v740 = vadd.f32 %v673, %v709
  %v741 = vadd.f32 %v674, %v710
  %v742 = vadd.f32 %v675, %v711
  %v743 = vadd.f32 %v676, %v712
  %v744 = vadd.f32 %v677, %v713
  %v745 = vadd.f32 %v678, %v714
  %v746 = vadd.f32 %v679, %v715
  %v747 = vadd.f32 %v680, %v716
  %v748 = vadd.f32 %v681, %v716
  %v749 = vlaneseq
  %v750 = vshrl.u32 %v749, 7
  %v751 = vsub.s32 7, %v750
  %v752 = vrot.slane %v52, %v751
  %v753 = vmul.f32 %v22, %v752
  %v754 = vmul.f32 %v23, %v752
  %v755 = vmul.f32 %v24, %v752
  %v756 = vmul.f32 %v25, %v752
  %v757 = vmul.f32 %v26, %v752
  %v758 = vmul.f32 %v27, %v752
  %v759 = vmul.f32 %v28, %v752
  %v760 = vmul.f32 %v29, %v752
  %v761 = vmul.f32 %v30, %v752
  %v762 = vmul.f32 %v31, %v752
  %v763 = vmul.f32 %v32, %v752
  %v764 = vmul.f32 %v33, %v752
  %v765 = vmul.f32 %v34, %v752
  %v766 = vmul.f32 %v35, %v752
  %v767 = vmul.f32 %v36, %v752
  %v768 = vmul.f32 %v37, %v752
  %v769 = vmul.f32 %v38, %v752
  %v770 = vmul.f32 %v39, %v752
  %v771 = vmul.f32 %v40, %v752
  %v772 = vmul.f32 %v41, %v752
  %v773 = vmul.f32 %v42, %v752
  %v774 = vmul.f32 %v43, %v752
  %v775 = vmul.f32 %v44, %v752
  %v776 = vmul.f32 %v45, %v752
  %v777 = vmul.f32 %v46, %v752
  %v778 = vmul.f32 %v47, %v752
  %v779 = vmul.f32 %v48, %v752
  %v780 = vmul.f32 %v49, %v752
  %v781 = vmul.f32 %v50, %v752
  %v782 = vmul.f32 %v51, %v752
  %v783 = vmul.f32 %v752, 0.0
  %v784 = vadd.f32 %v717, %v753
  %v785 = vadd.f32 %v718, %v754
  %v786 = vadd.f32 %v719, %v755
  %v787 = vadd.f32 %v720, %v756
  %v788 = vadd.f32 %v721, %v757
  %v789 = vadd.f32 %v722, %v758
  %v790 = vadd.f32 %v723, %v759
  %v791 = vadd.f32 %v724, %v760
  %v792 = vadd.f32 %v725, %v761
  %v793 = vadd.f32 %v726, %v762
  %v794 = vadd.f32 %v727, %v763
  %v795 = vadd.f32 %v728, %v764
  %v796 = vadd.f32 %v729, %v765
  %v797 = vadd.f32 %v730, %v766
  %v798 = vadd.f32 %v731, %v767
  %v799 = vadd.f32 %v732, %v768
  %v800 = vadd.f32 %v733, %v769
  %v801 = vadd.f32 %v734, %v770
  %v802 = vadd.f32 %v735, %v771
  %v803 = vadd.f32 %v736, %v772
  %v804 = vadd.f32 %v737, %v773
  %v805 = vadd.f32 %v738, %v774
  %v806 = vadd.f32 %v739, %v775
  %v807 = vadd.f32 %v740, %v776
  %v808 = vadd.f32 %v741, %v777
  %v809 = vadd.f32 %v742, %v778
  %v810 = vadd.f32 %v743, %v779
  %v811 = vadd.f32 %v744, %v780
  %v812 = vadd.f32 %v745, %v781
  %v813 = vadd.f32 %v746, %v782
  %v814 = vadd.f32 %v747, %v783
  %v815 = vadd.f32 %v748, %v783
  %v816 = vlaneseq
  %v817 = vshrl.u32 %v816, 7
  %v818 = vsub.s32 0, %v817
  %v819 = vrot.slane %v53, %v818
  %v820 = vmul.f32 %v189, %v819
  %v821 = vmul.f32 %v265, %v819
  %v822 = vmul.f32 %v192, %v819
  %v823 = vmul.f32 %v266, %v819
  %v824 = vmul.f32 %v195, %v819
  %v825 = vmul.f32 %v267, %v819
  %v826 = vmul.f32 %v198, %v819
  %v827 = vmul.f32 %v268, %v819
  %v828 = vmul.f32 %v201, %v819
  %v829 = vmul.f32 %v269, %v819
  %v830 = vmul.f32 %v204, %v819
  %v831 = vmul.f32 %v270, %v819
  %v832 = vmul.f32 %v207, %v819
  %v833 = vmul.f32 %v271, %v819
  %v834 = vmul.f32 %v210, %v819
  %v835 = vmul.f32 %v272, %v819
  %v836 = vmul.f32 %v213, %v819
  %v837 = vmul.f32 %v273, %v819
  %v838 = vmul.f32 %v216, %v819
  %v839 = vmul.f32 %v274, %v819
  %v840 = vmul.f32 %v219, %v819
  %v841 = vmul.f32 %v275, %v819
  %v842 = vmul.f32 %v222, %v819
  %v843 = vmul.f32 %v276, %v819
  %v844 = vmul.f32 %v225, %v819
  %v845 = vmul.f32 %v277, %v819
  %v846 = vmul.f32 %v228, %v819
  %v847 = vmul.f32 %v278, %v819
  %v848 = vmul.f32 %v231, %v819
  %v849 = vmul.f32 %v279, %v819
  %v850 = vmul.f32 %v819, 0.0
  %v851 = vadd.f32 %v784, %v820
  %v852 = vadd.f32 %v785, %v821
  %v853 = vadd.f32 %v786, %v822
  %v854 = vadd.f32 %v787, %v823
  %v855 = vadd.f32 %v788, %v824
  %v856 = vadd.f32 %v789, %v825
  %v857 = vadd.f32 %v790, %v826
  %v858 = vadd.f32 %v791, %v827
  %v859 = vadd.f32 %v792, %v828
  %v860 = vadd.f32 %v793, %v829
  %v861 = vadd.f32 %v794, %v830
  %v862 = vadd.f32 %v795, %v831
  %v863 = vadd.f32 %v796, %v832
  %v864 = vadd.f32 %v797, %v833
  %v865 = vadd.f32 %v798, %v834
  %v866 = vadd.f32 %v799, %v835
  %v867 = vadd.f32 %v800, %v836
  %v868 = vadd.f32 %v801, %v837
  %v869 = vadd.f32 %v802, %v838
  %v870 = vadd.f32 %v803, %v839
  %v871 = vadd.f32 %v804, %v840
  %v872 = vadd.f32 %v805, %v841
  %v873 = vadd.f32 %v806, %v842
  %v874 = vadd.f32 %v807, %v843
  %v875 = vadd.f32 %v808, %v844
  %v876 = vadd.f32 %v809, %v845
  %v877 = vadd.f32 %v810, %v846
  %v878 = vadd.f32 %v811, %v847
  %v879 = vadd.f32 %v812, %v848
  %v880 = vadd.f32 %v813, %v849
  %v881 = vadd.f32 %v814, %v850
  %v882 = vadd.f32 %v815, %v850
  %v883 = vld [vmem:[%s1] sm:$0x1]
  %v885 = vlaneseq
  %v886 = vshrl.u32 %v885, 7
  %v887 = vsub.s32 0, %v886
  %v888 = vrot.slane %v883, %v887
  %v890 = vadd.f32 %v851, %v888
  %v891 = vadd.f32 %v852, %v888
  %v892 = vadd.f32 %v853, %v888
  %v893 = vadd.f32 %v854, %v888
  %v894 = vadd.f32 %v855, %v888
  %v895 = vadd.f32 %v856, %v888
  %v896 = vadd.f32 %v857, %v888
  %v897 = vadd.f32 %v858, %v888
  %v898 = vadd.f32 %v859, %v888
  %v899 = vadd.f32 %v860, %v888
  %v900 = vadd.f32 %v861, %v888
  %v901 = vadd.f32 %v862, %v888
  %v902 = vadd.f32 %v863, %v888
  %v903 = vadd.f32 %v864, %v888
  %v904 = vadd.f32 %v865, %v888
  %v905 = vadd.f32 %v866, %v888
  %v906 = vadd.f32 %v867, %v888
  %v907 = vadd.f32 %v868, %v888
  %v908 = vadd.f32 %v869, %v888
  %v909 = vadd.f32 %v870, %v888
  %v910 = vadd.f32 %v871, %v888
  %v911 = vadd.f32 %v872, %v888
  %v912 = vadd.f32 %v873, %v888
  %v913 = vadd.f32 %v874, %v888
  %v914 = vadd.f32 %v875, %v888
  %v915 = vadd.f32 %v876, %v888
  %v916 = vadd.f32 %v877, %v888
  %v917 = vadd.f32 %v878, %v888
  %v918 = vadd.f32 %v879, %v888
  %v919 = vadd.f32 %v880, %v888
  %v920 = vadd.f32 %v881, %v888
  %v921 = vadd.f32 %v882, %v888
  %v922 = vmul.f32 %v890, 0.70710677
  %v923 = vmul.f32 %v891, 0.70710677
  %v924 = vmul.f32 %v892, 0.70710677
  %v925 = vmul.f32 %v893, 0.70710677
  %v926 = vmul.f32 %v894, 0.70710677
  %v927 = vmul.f32 %v895, 0.70710677
  %v928 = vmul.f32 %v896, 0.70710677
  %v929 = vmul.f32 %v897, 0.70710677
  %v930 = vmul.f32 %v898, 0.70710677
  %v931 = vmul.f32 %v899, 0.70710677
  %v932 = vmul.f32 %v900, 0.70710677
  %v933 = vmul.f32 %v901, 0.70710677
  %v934 = vmul.f32 %v902, 0.70710677
  %v935 = vmul.f32 %v903, 0.70710677
  %v936 = vmul.f32 %v904, 0.70710677
  %v937 = vmul.f32 %v905, 0.70710677
  %v938 = vmul.f32 %v906, 0.70710677
  %v939 = vmul.f32 %v907, 0.70710677
  %v940 = vmul.f32 %v908, 0.70710677
  %v941 = vmul.f32 %v909, 0.70710677
  %v942 = vmul.f32 %v910, 0.70710677
  %v943 = vmul.f32 %v911, 0.70710677
  %v944 = vmul.f32 %v912, 0.70710677
  %v945 = vmul.f32 %v913, 0.70710677
  %v946 = vmul.f32 %v914, 0.70710677
  %v947 = vmul.f32 %v915, 0.70710677
  %v948 = vmul.f32 %v916, 0.70710677
  %v949 = vmul.f32 %v917, 0.70710677
  %v950 = vmul.f32 %v918, 0.70710677
  %v951 = vmul.f32 %v919, 0.70710677
  %v952 = vmul.f32 %v920, 0.70710677
  %v953 = vmul.f32 %v921, 0.70710677
  %v954 = vand.u32 2147483647, %v922
  %v955 = vand.u32 2147483647, %v923
  %v956 = vand.u32 2147483647, %v924
  %v957 = vand.u32 2147483647, %v925
  %v958 = vand.u32 2147483647, %v926
  %v959 = vand.u32 2147483647, %v927
  %v960 = vand.u32 2147483647, %v928
  %v961 = vand.u32 2147483647, %v929
  %v962 = vand.u32 2147483647, %v930
  %v963 = vand.u32 2147483647, %v931
  %v964 = vand.u32 2147483647, %v932
  %v965 = vand.u32 2147483647, %v933
  %v966 = vand.u32 2147483647, %v934
  %v967 = vand.u32 2147483647, %v935
  %v968 = vand.u32 2147483647, %v936
  %v969 = vand.u32 2147483647, %v937
  %v970 = vand.u32 2147483647, %v938
  %v971 = vand.u32 2147483647, %v939
  %v972 = vand.u32 2147483647, %v940
  %v973 = vand.u32 2147483647, %v941
  %v974 = vand.u32 2147483647, %v942
  %v975 = vand.u32 2147483647, %v943
  %v976 = vand.u32 2147483647, %v944
  %v977 = vand.u32 2147483647, %v945
  %v978 = vand.u32 2147483647, %v946
  %v979 = vand.u32 2147483647, %v947
  %v980 = vand.u32 2147483647, %v948
  %v981 = vand.u32 2147483647, %v949
  %v982 = vand.u32 2147483647, %v950
  %v983 = vand.u32 2147483647, %v951
  %v984 = vand.u32 2147483647, %v952
  %v985 = vand.u32 2147483647, %v953
  %v986 = vmul.f32 %v954, 0.3275911
  %v987 = vmul.f32 %v955, 0.3275911
  %v988 = vmul.f32 %v956, 0.3275911
  %v989 = vmul.f32 %v957, 0.3275911
  %v990 = vmul.f32 %v958, 0.3275911
  %v991 = vmul.f32 %v959, 0.3275911
  %v992 = vmul.f32 %v960, 0.3275911
  %v993 = vmul.f32 %v961, 0.3275911
  %v994 = vmul.f32 %v962, 0.3275911
  %v995 = vmul.f32 %v963, 0.3275911
  %v996 = vmul.f32 %v964, 0.3275911
  %v997 = vmul.f32 %v965, 0.3275911
  %v998 = vmul.f32 %v966, 0.3275911
  %v999 = vmul.f32 %v967, 0.3275911
  %v1000 = vmul.f32 %v968, 0.3275911
  %v1001 = vmul.f32 %v969, 0.3275911
  %v1002 = vmul.f32 %v970, 0.3275911
  %v1003 = vmul.f32 %v971, 0.3275911
  %v1004 = vmul.f32 %v972, 0.3275911
  %v1005 = vmul.f32 %v973, 0.3275911
  %v1006 = vmul.f32 %v974, 0.3275911
  %v1007 = vmul.f32 %v975, 0.3275911
  %v1008 = vmul.f32 %v976, 0.3275911
  %v1009 = vmul.f32 %v977, 0.3275911
  %v1010 = vmul.f32 %v978, 0.3275911
  %v1011 = vmul.f32 %v979, 0.3275911
  %v1012 = vmul.f32 %v980, 0.3275911
  %v1013 = vmul.f32 %v981, 0.3275911
  %v1014 = vmul.f32 %v982, 0.3275911
  %v1015 = vmul.f32 %v983, 0.3275911
  %v1016 = vmul.f32 %v984, 0.3275911
  %v1017 = vmul.f32 %v985, 0.3275911
  %v1018 = vadd.f32 %v986, 1.0
  %v1019 = vadd.f32 %v987, 1.0
  %v1020 = vadd.f32 %v988, 1.0
  %v1021 = vadd.f32 %v989, 1.0
  %v1022 = vadd.f32 %v990, 1.0
  %v1023 = vadd.f32 %v991, 1.0
  %v1024 = vadd.f32 %v992, 1.0
  %v1025 = vadd.f32 %v993, 1.0
  %v1026 = vadd.f32 %v994, 1.0
  %v1027 = vadd.f32 %v995, 1.0
  %v1028 = vadd.f32 %v996, 1.0
  %v1029 = vadd.f32 %v997, 1.0
  %v1030 = vadd.f32 %v998, 1.0
  %v1031 = vadd.f32 %v999, 1.0
  %v1032 = vadd.f32 %v1000, 1.0
  %v1033 = vadd.f32 %v1001, 1.0
  %v1034 = vadd.f32 %v1002, 1.0
  %v1035 = vadd.f32 %v1003, 1.0
  %v1036 = vadd.f32 %v1004, 1.0
  %v1037 = vadd.f32 %v1005, 1.0
  %v1038 = vadd.f32 %v1006, 1.0
  %v1039 = vadd.f32 %v1007, 1.0
  %v1040 = vadd.f32 %v1008, 1.0
  %v1041 = vadd.f32 %v1009, 1.0
  %v1042 = vadd.f32 %v1010, 1.0
  %v1043 = vadd.f32 %v1011, 1.0
  %v1044 = vadd.f32 %v1012, 1.0
  %v1045 = vadd.f32 %v1013, 1.0
  %v1046 = vadd.f32 %v1014, 1.0
  %v1047 = vadd.f32 %v1015, 1.0
  %v1048 = vadd.f32 %v1016, 1.0
  %v1049 = vadd.f32 %v1017, 1.0
  %v1050 = vrcp.pop %v1018
  %v1051 = vrcp.pop %v1019
  %v1052 = vrcp.pop %v1020
  %v1053 = vrcp.pop %v1021
  %v1054 = vrcp.pop %v1022
  %v1055 = vrcp.pop %v1023
  %v1056 = vrcp.pop %v1024
  %v1057 = vrcp.pop %v1025
  %v1058 = vrcp.pop %v1026
  %v1059 = vrcp.pop %v1027
  %v1060 = vrcp.pop %v1028
  %v1061 = vrcp.pop %v1029
  %v1062 = vrcp.pop %v1030
  %v1063 = vrcp.pop %v1031
  %v1064 = vrcp.pop %v1032
  %v1065 = vrcp.pop %v1033
  %v1066 = vrcp.pop %v1034
  %v1067 = vrcp.pop %v1035
  %v1068 = vrcp.pop %v1036
  %v1069 = vrcp.pop %v1037
  %v1070 = vrcp.pop %v1038
  %v1071 = vrcp.pop %v1039
  %v1072 = vrcp.pop %v1040
  %v1073 = vrcp.pop %v1041
  %v1074 = vrcp.pop %v1042
  %v1075 = vrcp.pop %v1043
  %v1076 = vrcp.pop %v1044
  %v1077 = vrcp.pop %v1045
  %v1078 = vrcp.pop %v1046
  %v1079 = vrcp.pop %v1047
  %v1080 = vrcp.pop %v1048
  %v1081 = vrcp.pop %v1049
  %v1082 = vmul.f32 %v1018, %v1050
  %v1083 = vmul.f32 %v1019, %v1051
  %v1084 = vmul.f32 %v1020, %v1052
  %v1085 = vmul.f32 %v1021, %v1053
  %v1086 = vmul.f32 %v1022, %v1054
  %v1087 = vmul.f32 %v1023, %v1055
  %v1088 = vmul.f32 %v1024, %v1056
  %v1089 = vmul.f32 %v1025, %v1057
  %v1090 = vmul.f32 %v1026, %v1058
  %v1091 = vmul.f32 %v1027, %v1059
  %v1092 = vmul.f32 %v1028, %v1060
  %v1093 = vmul.f32 %v1029, %v1061
  %v1094 = vmul.f32 %v1030, %v1062
  %v1095 = vmul.f32 %v1031, %v1063
  %v1096 = vmul.f32 %v1032, %v1064
  %v1097 = vmul.f32 %v1033, %v1065
  %v1098 = vmul.f32 %v1034, %v1066
  %v1099 = vmul.f32 %v1035, %v1067
  %v1100 = vmul.f32 %v1036, %v1068
  %v1101 = vmul.f32 %v1037, %v1069
  %v1102 = vmul.f32 %v1038, %v1070
  %v1103 = vmul.f32 %v1039, %v1071
  %v1104 = vmul.f32 %v1040, %v1072
  %v1105 = vmul.f32 %v1041, %v1073
  %v1106 = vmul.f32 %v1042, %v1074
  %v1107 = vmul.f32 %v1043, %v1075
  %v1108 = vmul.f32 %v1044, %v1076
  %v1109 = vmul.f32 %v1045, %v1077
  %v1110 = vmul.f32 %v1046, %v1078
  %v1111 = vmul.f32 %v1047, %v1079
  %v1112 = vmul.f32 %v1048, %v1080
  %v1113 = vmul.f32 %v1049, %v1081
  %v1114 = vsub.f32 2.0, %v1082
  %v1115 = vsub.f32 2.0, %v1083
  %v1116 = vsub.f32 2.0, %v1084
  %v1117 = vsub.f32 2.0, %v1085
  %v1118 = vsub.f32 2.0, %v1086
  %v1119 = vsub.f32 2.0, %v1087
  %v1120 = vsub.f32 2.0, %v1088
  %v1121 = vsub.f32 2.0, %v1089
  %v1122 = vsub.f32 2.0, %v1090
  %v1123 = vsub.f32 2.0, %v1091
  %v1124 = vsub.f32 2.0, %v1092
  %v1125 = vsub.f32 2.0, %v1093
  %v1126 = vsub.f32 2.0, %v1094
  %v1127 = vsub.f32 2.0, %v1095
  %v1128 = vsub.f32 2.0, %v1096
  %v1129 = vsub.f32 2.0, %v1097
  %v1130 = vsub.f32 2.0, %v1098
  %v1131 = vsub.f32 2.0, %v1099
  %v1132 = vsub.f32 2.0, %v1100
  %v1133 = vsub.f32 2.0, %v1101
  %v1134 = vsub.f32 2.0, %v1102
  %v1135 = vsub.f32 2.0, %v1103
  %v1136 = vsub.f32 2.0, %v1104
  %v1137 = vsub.f32 2.0, %v1105
  %v1138 = vsub.f32 2.0, %v1106
  %v1139 = vsub.f32 2.0, %v1107
  %v1140 = vsub.f32 2.0, %v1108
  %v1141 = vsub.f32 2.0, %v1109
  %v1142 = vsub.f32 2.0, %v1110
  %v1143 = vsub.f32 2.0, %v1111
  %v1144 = vsub.f32 2.0, %v1112
  %v1145 = vsub.f32 2.0, %v1113
  %v1146 = vmul.f32 %v1050, %v1114
  %v1147 = vmul.f32 %v1051, %v1115
  %v1148 = vmul.f32 %v1052, %v1116
  %v1149 = vmul.f32 %v1053, %v1117
  %v1150 = vmul.f32 %v1054, %v1118
  %v1151 = vmul.f32 %v1055, %v1119
  %v1152 = vmul.f32 %v1056, %v1120
  %v1153 = vmul.f32 %v1057, %v1121
  %v1154 = vmul.f32 %v1058, %v1122
  %v1155 = vmul.f32 %v1059, %v1123
  %v1156 = vmul.f32 %v1060, %v1124
  %v1157 = vmul.f32 %v1061, %v1125
  %v1158 = vmul.f32 %v1062, %v1126
  %v1159 = vmul.f32 %v1063, %v1127
  %v1160 = vmul.f32 %v1064, %v1128
  %v1161 = vmul.f32 %v1065, %v1129
  %v1162 = vmul.f32 %v1066, %v1130
  %v1163 = vmul.f32 %v1067, %v1131
  %v1164 = vmul.f32 %v1068, %v1132
  %v1165 = vmul.f32 %v1069, %v1133
  %v1166 = vmul.f32 %v1070, %v1134
  %v1167 = vmul.f32 %v1071, %v1135
  %v1168 = vmul.f32 %v1072, %v1136
  %v1169 = vmul.f32 %v1073, %v1137
  %v1170 = vmul.f32 %v1074, %v1138
  %v1171 = vmul.f32 %v1075, %v1139
  %v1172 = vmul.f32 %v1076, %v1140
  %v1173 = vmul.f32 %v1077, %v1141
  %v1174 = vmul.f32 %v1078, %v1142
  %v1175 = vmul.f32 %v1079, %v1143
  %v1176 = vmul.f32 %v1080, %v1144
  %v1177 = vmul.f32 %v1081, %v1145
  %v1178 = vmul.f32 %v1146, 1.0614054
  %v1179 = vmul.f32 %v1147, 1.0614054
  %v1180 = vmul.f32 %v1148, 1.0614054
  %v1181 = vmul.f32 %v1149, 1.0614054
  %v1182 = vmul.f32 %v1150, 1.0614054
  %v1183 = vmul.f32 %v1151, 1.0614054
  %v1184 = vmul.f32 %v1152, 1.0614054
  %v1185 = vmul.f32 %v1153, 1.0614054
  %v1186 = vmul.f32 %v1154, 1.0614054
  %v1187 = vmul.f32 %v1155, 1.0614054
  %v1188 = vmul.f32 %v1156, 1.0614054
  %v1189 = vmul.f32 %v1157, 1.0614054
  %v1190 = vmul.f32 %v1158, 1.0614054
  %v1191 = vmul.f32 %v1159, 1.0614054
  %v1192 = vmul.f32 %v1160, 1.0614054
  %v1193 = vmul.f32 %v1161, 1.0614054
  %v1194 = vmul.f32 %v1162, 1.0614054
  %v1195 = vmul.f32 %v1163, 1.0614054
  %v1196 = vmul.f32 %v1164, 1.0614054
  %v1197 = vmul.f32 %v1165, 1.0614054
  %v1198 = vmul.f32 %v1166, 1.0614054
  %v1199 = vmul.f32 %v1167, 1.0614054
  %v1200 = vmul.f32 %v1168, 1.0614054
  %v1201 = vmul.f32 %v1169, 1.0614054
  %v1202 = vmul.f32 %v1170, 1.0614054
  %v1203 = vmul.f32 %v1171, 1.0614054
  %v1204 = vmul.f32 %v1172, 1.0614054
  %v1205 = vmul.f32 %v1173, 1.0614054
  %v1206 = vmul.f32 %v1174, 1.0614054
  %v1207 = vmul.f32 %v1175, 1.0614054
  %v1208 = vmul.f32 %v1176, 1.0614054
  %v1209 = vmul.f32 %v1177, 1.0614054
  %v1210 = vadd.f32 %v1178, -1.4531521
  %v1211 = vadd.f32 %v1179, -1.4531521
  %v1212 = vadd.f32 %v1180, -1.4531521
  %v1213 = vadd.f32 %v1181, -1.4531521
  %v1214 = vadd.f32 %v1182, -1.4531521
  %v1215 = vadd.f32 %v1183, -1.4531521
  %v1216 = vadd.f32 %v1184, -1.4531521
  %v1217 = vadd.f32 %v1185, -1.4531521
  %v1218 = vadd.f32 %v1186, -1.4531521
  %v1219 = vadd.f32 %v1187, -1.4531521
  %v1220 = vadd.f32 %v1188, -1.4531521
  %v1221 = vadd.f32 %v1189, -1.4531521
  %v1222 = vadd.f32 %v1190, -1.4531521
  %v1223 = vadd.f32 %v1191, -1.4531521
  %v1224 = vadd.f32 %v1192, -1.4531521
  %v1225 = vadd.f32 %v1193, -1.4531521
  %v1226 = vadd.f32 %v1194, -1.4531521
  %v1227 = vadd.f32 %v1195, -1.4531521
  %v1228 = vadd.f32 %v1196, -1.4531521
  %v1229 = vadd.f32 %v1197, -1.4531521
  %v1230 = vadd.f32 %v1198, -1.4531521
  %v1231 = vadd.f32 %v1199, -1.4531521
  %v1232 = vadd.f32 %v1200, -1.4531521
  %v1233 = vadd.f32 %v1201, -1.4531521
  %v1234 = vadd.f32 %v1202, -1.4531521
  %v1235 = vadd.f32 %v1203, -1.4531521
  %v1236 = vadd.f32 %v1204, -1.4531521
  %v1237 = vadd.f32 %v1205, -1.4531521
  %v1238 = vadd.f32 %v1206, -1.4531521
  %v1239 = vadd.f32 %v1207, -1.4531521
  %v1240 = vadd.f32 %v1208, -1.4531521
  %v1241 = vadd.f32 %v1209, -1.4531521
  %v1242 = vmul.f32 %v1146, %v1210
  %v1243 = vmul.f32 %v1147, %v1211
  %v1244 = vmul.f32 %v1148, %v1212
  %v1245 = vmul.f32 %v1149, %v1213
  %v1246 = vmul.f32 %v1150, %v1214
  %v1247 = vmul.f32 %v1151, %v1215
  %v1248 = vmul.f32 %v1152, %v1216
  %v1249 = vmul.f32 %v1153, %v1217
  %v1250 = vmul.f32 %v1154, %v1218
  %v1251 = vmul.f32 %v1155, %v1219
  %v1252 = vmul.f32 %v1156, %v1220
  %v1253 = vmul.f32 %v1157, %v1221
  %v1254 = vmul.f32 %v1158, %v1222
  %v1255 = vmul.f32 %v1159, %v1223
  %v1256 = vmul.f32 %v1160, %v1224
  %v1257 = vmul.f32 %v1161, %v1225
  %v1258 = vmul.f32 %v1162, %v1226
  %v1259 = vmul.f32 %v1163, %v1227
  %v1260 = vmul.f32 %v1164, %v1228
  %v1261 = vmul.f32 %v1165, %v1229
  %v1262 = vmul.f32 %v1166, %v1230
  %v1263 = vmul.f32 %v1167, %v1231
  %v1264 = vmul.f32 %v1168, %v1232
  %v1265 = vmul.f32 %v1169, %v1233
  %v1266 = vmul.f32 %v1170, %v1234
  %v1267 = vmul.f32 %v1171, %v1235
  %v1268 = vmul.f32 %v1172, %v1236
  %v1269 = vmul.f32 %v1173, %v1237
  %v1270 = vmul.f32 %v1174, %v1238
  %v1271 = vmul.f32 %v1175, %v1239
  %v1272 = vmul.f32 %v1176, %v1240
  %v1273 = vmul.f32 %v1177, %v1241
  %v1274 = vadd.f32 %v1242, 1.4214138
  %v1275 = vadd.f32 %v1243, 1.4214138
  %v1276 = vadd.f32 %v1244, 1.4214138
  %v1277 = vadd.f32 %v1245, 1.4214138
  %v1278 = vadd.f32 %v1246, 1.4214138
  %v1279 = vadd.f32 %v1247, 1.4214138
  %v1280 = vadd.f32 %v1248, 1.4214138
  %v1281 = vadd.f32 %v1249, 1.4214138
  %v1282 = vadd.f32 %v1250, 1.4214138
  %v1283 = vadd.f32 %v1251, 1.4214138
  %v1284 = vadd.f32 %v1252, 1.4214138
  %v1285 = vadd.f32 %v1253, 1.4214138
  %v1286 = vadd.f32 %v1254, 1.4214138
  %v1287 = vadd.f32 %v1255, 1.4214138
  %v1288 = vadd.f32 %v1256, 1.4214138
  %v1289 = vadd.f32 %v1257, 1.4214138
  %v1290 = vadd.f32 %v1258, 1.4214138
  %v1291 = vadd.f32 %v1259, 1.4214138
  %v1292 = vadd.f32 %v1260, 1.4214138
  %v1293 = vadd.f32 %v1261, 1.4214138
  %v1294 = vadd.f32 %v1262, 1.4214138
  %v1295 = vadd.f32 %v1263, 1.4214138
  %v1296 = vadd.f32 %v1264, 1.4214138
  %v1297 = vadd.f32 %v1265, 1.4214138
  %v1298 = vadd.f32 %v1266, 1.4214138
  %v1299 = vadd.f32 %v1267, 1.4214138
  %v1300 = vadd.f32 %v1268, 1.4214138
  %v1301 = vadd.f32 %v1269, 1.4214138
  %v1302 = vadd.f32 %v1270, 1.4214138
  %v1303 = vadd.f32 %v1271, 1.4214138
  %v1304 = vadd.f32 %v1272, 1.4214138
  %v1305 = vadd.f32 %v1273, 1.4214138
  %v1306 = vmul.f32 %v1146, %v1274
  %v1307 = vmul.f32 %v1147, %v1275
  %v1308 = vmul.f32 %v1148, %v1276
  %v1309 = vmul.f32 %v1149, %v1277
  %v1310 = vmul.f32 %v1150, %v1278
  %v1311 = vmul.f32 %v1151, %v1279
  %v1312 = vmul.f32 %v1152, %v1280
  %v1313 = vmul.f32 %v1153, %v1281
  %v1314 = vmul.f32 %v1154, %v1282
  %v1315 = vmul.f32 %v1155, %v1283
  %v1316 = vmul.f32 %v1156, %v1284
  %v1317 = vmul.f32 %v1157, %v1285
  %v1318 = vmul.f32 %v1158, %v1286
  %v1319 = vmul.f32 %v1159, %v1287
  %v1320 = vmul.f32 %v1160, %v1288
  %v1321 = vmul.f32 %v1161, %v1289
  %v1322 = vmul.f32 %v1162, %v1290
  %v1323 = vmul.f32 %v1163, %v1291
  %v1324 = vmul.f32 %v1164, %v1292
  %v1325 = vmul.f32 %v1165, %v1293
  %v1326 = vmul.f32 %v1166, %v1294
  %v1327 = vmul.f32 %v1167, %v1295
  %v1328 = vmul.f32 %v1168, %v1296
  %v1329 = vmul.f32 %v1169, %v1297
  %v1330 = vmul.f32 %v1170, %v1298
  %v1331 = vmul.f32 %v1171, %v1299
  %v1332 = vmul.f32 %v1172, %v1300
  %v1333 = vmul.f32 %v1173, %v1301
  %v1334 = vmul.f32 %v1174, %v1302
  %v1335 = vmul.f32 %v1175, %v1303
  %v1336 = vmul.f32 %v1176, %v1304
  %v1337 = vmul.f32 %v1177, %v1305
  %v1338 = vadd.f32 %v1306, -0.28449672
  %v1339 = vadd.f32 %v1307, -0.28449672
  %v1340 = vadd.f32 %v1308, -0.28449672
  %v1341 = vadd.f32 %v1309, -0.28449672
  %v1342 = vadd.f32 %v1310, -0.28449672
  %v1343 = vadd.f32 %v1311, -0.28449672
  %v1344 = vadd.f32 %v1312, -0.28449672
  %v1345 = vadd.f32 %v1313, -0.28449672
  %v1346 = vadd.f32 %v1314, -0.28449672
  %v1347 = vadd.f32 %v1315, -0.28449672
  %v1348 = vadd.f32 %v1316, -0.28449672
  %v1349 = vadd.f32 %v1317, -0.28449672
  %v1350 = vadd.f32 %v1318, -0.28449672
  %v1351 = vadd.f32 %v1319, -0.28449672
  %v1352 = vadd.f32 %v1320, -0.28449672
  %v1353 = vadd.f32 %v1321, -0.28449672
  %v1354 = vadd.f32 %v1322, -0.28449672
  %v1355 = vadd.f32 %v1323, -0.28449672
  %v1356 = vadd.f32 %v1324, -0.28449672
  %v1357 = vadd.f32 %v1325, -0.28449672
  %v1358 = vadd.f32 %v1326, -0.28449672
  %v1359 = vadd.f32 %v1327, -0.28449672
  %v1360 = vadd.f32 %v1328, -0.28449672
  %v1361 = vadd.f32 %v1329, -0.28449672
  %v1362 = vadd.f32 %v1330, -0.28449672
  %v1363 = vadd.f32 %v1331, -0.28449672
  %v1364 = vadd.f32 %v1332, -0.28449672
  %v1365 = vadd.f32 %v1333, -0.28449672
  %v1366 = vadd.f32 %v1334, -0.28449672
  %v1367 = vadd.f32 %v1335, -0.28449672
  %v1368 = vadd.f32 %v1336, -0.28449672
  %v1369 = vadd.f32 %v1337, -0.28449672
  %v1370 = vmul.f32 %v1146, %v1338
  %v1371 = vmul.f32 %v1147, %v1339
  %v1372 = vmul.f32 %v1148, %v1340
  %v1373 = vmul.f32 %v1149, %v1341
  %v1374 = vmul.f32 %v1150, %v1342
  %v1375 = vmul.f32 %v1151, %v1343
  %v1376 = vmul.f32 %v1152, %v1344
  %v1377 = vmul.f32 %v1153, %v1345
  %v1378 = vmul.f32 %v1154, %v1346
  %v1379 = vmul.f32 %v1155, %v1347
  %v1380 = vmul.f32 %v1156, %v1348
  %v1381 = vmul.f32 %v1157, %v1349
  %v1382 = vmul.f32 %v1158, %v1350
  %v1383 = vmul.f32 %v1159, %v1351
  %v1384 = vmul.f32 %v1160, %v1352
  %v1385 = vmul.f32 %v1161, %v1353
  %v1386 = vmul.f32 %v1162, %v1354
  %v1387 = vmul.f32 %v1163, %v1355
  %v1388 = vmul.f32 %v1164, %v1356
  %v1389 = vmul.f32 %v1165, %v1357
  %v1390 = vmul.f32 %v1166, %v1358
  %v1391 = vmul.f32 %v1167, %v1359
  %v1392 = vmul.f32 %v1168, %v1360
  %v1393 = vmul.f32 %v1169, %v1361
  %v1394 = vmul.f32 %v1170, %v1362
  %v1395 = vmul.f32 %v1171, %v1363
  %v1396 = vmul.f32 %v1172, %v1364
  %v1397 = vmul.f32 %v1173, %v1365
  %v1398 = vmul.f32 %v1174, %v1366
  %v1399 = vmul.f32 %v1175, %v1367
  %v1400 = vmul.f32 %v1176, %v1368
  %v1401 = vmul.f32 %v1177, %v1369
  %v1402 = vadd.f32 %v1370, 0.2548296
  %v1403 = vadd.f32 %v1371, 0.2548296
  %v1404 = vadd.f32 %v1372, 0.2548296
  %v1405 = vadd.f32 %v1373, 0.2548296
  %v1406 = vadd.f32 %v1374, 0.2548296
  %v1407 = vadd.f32 %v1375, 0.2548296
  %v1408 = vadd.f32 %v1376, 0.2548296
  %v1409 = vadd.f32 %v1377, 0.2548296
  %v1410 = vadd.f32 %v1378, 0.2548296
  %v1411 = vadd.f32 %v1379, 0.2548296
  %v1412 = vadd.f32 %v1380, 0.2548296
  %v1413 = vadd.f32 %v1381, 0.2548296
  %v1414 = vadd.f32 %v1382, 0.2548296
  %v1415 = vadd.f32 %v1383, 0.2548296
  %v1416 = vadd.f32 %v1384, 0.2548296
  %v1417 = vadd.f32 %v1385, 0.2548296
  %v1418 = vadd.f32 %v1386, 0.2548296
  %v1419 = vadd.f32 %v1387, 0.2548296
  %v1420 = vadd.f32 %v1388, 0.2548296
  %v1421 = vadd.f32 %v1389, 0.2548296
  %v1422 = vadd.f32 %v1390, 0.2548296
  %v1423 = vadd.f32 %v1391, 0.2548296
  %v1424 = vadd.f32 %v1392, 0.2548296
  %v1425 = vadd.f32 %v1393, 0.2548296
  %v1426 = vadd.f32 %v1394, 0.2548296
  %v1427 = vadd.f32 %v1395, 0.2548296
  %v1428 = vadd.f32 %v1396, 0.2548296
  %v1429 = vadd.f32 %v1397, 0.2548296
  %v1430 = vadd.f32 %v1398, 0.2548296
  %v1431 = vadd.f32 %v1399, 0.2548296
  %v1432 = vadd.f32 %v1400, 0.2548296
  %v1433 = vadd.f32 %v1401, 0.2548296
  %v1434 = vmul.f32 %v1146, %v1402
  %v1435 = vmul.f32 %v1147, %v1403
  %v1436 = vmul.f32 %v1148, %v1404
  %v1437 = vmul.f32 %v1149, %v1405
  %v1438 = vmul.f32 %v1150, %v1406
  %v1439 = vmul.f32 %v1151, %v1407
  %v1440 = vmul.f32 %v1152, %v1408
  %v1441 = vmul.f32 %v1153, %v1409
  %v1442 = vmul.f32 %v1154, %v1410
  %v1443 = vmul.f32 %v1155, %v1411
  %v1444 = vmul.f32 %v1156, %v1412
  %v1445 = vmul.f32 %v1157, %v1413
  %v1446 = vmul.f32 %v1158, %v1414
  %v1447 = vmul.f32 %v1159, %v1415
  %v1448 = vmul.f32 %v1160, %v1416
  %v1449 = vmul.f32 %v1161, %v1417
  %v1450 = vmul.f32 %v1162, %v1418
  %v1451 = vmul.f32 %v1163, %v1419
  %v1452 = vmul.f32 %v1164, %v1420
  %v1453 = vmul.f32 %v1165, %v1421
  %v1454 = vmul.f32 %v1166, %v1422
  %v1455 = vmul.f32 %v1167, %v1423
  %v1456 = vmul.f32 %v1168, %v1424
  %v1457 = vmul.f32 %v1169, %v1425
  %v1458 = vmul.f32 %v1170, %v1426
  %v1459 = vmul.f32 %v1171, %v1427
  %v1460 = vmul.f32 %v1172, %v1428
  %v1461 = vmul.f32 %v1173, %v1429
  %v1462 = vmul.f32 %v1174, %v1430
  %v1463 = vmul.f32 %v1175, %v1431
  %v1464 = vmul.f32 %v1176, %v1432
  %v1465 = vmul.f32 %v1177, %v1433
  %v1466 = vsub.f32 0.0, %v954
  %v1467 = vsub.f32 0.0, %v955
  %v1468 = vsub.f32 0.0, %v956
  %v1469 = vsub.f32 0.0, %v957
  %v1470 = vsub.f32 0.0, %v958
  %v1471 = vsub.f32 0.0, %v959
  %v1472 = vsub.f32 0.0, %v960
  %v1473 = vsub.f32 0.0, %v961
  %v1474 = vsub.f32 0.0, %v962
  %v1475 = vsub.f32 0.0, %v963
  %v1476 = vsub.f32 0.0, %v964
  %v1477 = vsub.f32 0.0, %v965
  %v1478 = vsub.f32 0.0, %v966
  %v1479 = vsub.f32 0.0, %v967
  %v1480 = vsub.f32 0.0, %v968
  %v1481 = vsub.f32 0.0, %v969
  %v1482 = vsub.f32 0.0, %v970
  %v1483 = vsub.f32 0.0, %v971
  %v1484 = vsub.f32 0.0, %v972
  %v1485 = vsub.f32 0.0, %v973
  %v1486 = vsub.f32 0.0, %v974
  %v1487 = vsub.f32 0.0, %v975
  %v1488 = vsub.f32 0.0, %v976
  %v1489 = vsub.f32 0.0, %v977
  %v1490 = vsub.f32 0.0, %v978
  %v1491 = vsub.f32 0.0, %v979
  %v1492 = vsub.f32 0.0, %v980
  %v1493 = vsub.f32 0.0, %v981
  %v1494 = vsub.f32 0.0, %v982
  %v1495 = vsub.f32 0.0, %v983
  %v1496 = vsub.f32 0.0, %v984
  %v1497 = vsub.f32 0.0, %v985
  %v1498 = vmul.f32 %v1466, %v954
  %v1499 = vmul.f32 %v1467, %v955
  %v1500 = vmul.f32 %v1468, %v956
  %v1501 = vmul.f32 %v1469, %v957
  %v1502 = vmul.f32 %v1470, %v958
  %v1503 = vmul.f32 %v1471, %v959
  %v1504 = vmul.f32 %v1472, %v960
  %v1505 = vmul.f32 %v1473, %v961
  %v1506 = vmul.f32 %v1474, %v962
  %v1507 = vmul.f32 %v1475, %v963
  %v1508 = vmul.f32 %v1476, %v964
  %v1509 = vmul.f32 %v1477, %v965
  %v1510 = vmul.f32 %v1478, %v966
  %v1511 = vmul.f32 %v1479, %v967
  %v1512 = vmul.f32 %v1480, %v968
  %v1513 = vmul.f32 %v1481, %v969
  %v1514 = vmul.f32 %v1482, %v970
  %v1515 = vmul.f32 %v1483, %v971
  %v1516 = vmul.f32 %v1484, %v972
  %v1517 = vmul.f32 %v1485, %v973
  %v1518 = vmul.f32 %v1486, %v974
  %v1519 = vmul.f32 %v1487, %v975
  %v1520 = vmul.f32 %v1488, %v976
  %v1521 = vmul.f32 %v1489, %v977
  %v1522 = vmul.f32 %v1490, %v978
  %v1523 = vmul.f32 %v1491, %v979
  %v1524 = vmul.f32 %v1492, %v980
  %v1525 = vmul.f32 %v1493, %v981
  %v1526 = vmul.f32 %v1494, %v982
  %v1527 = vmul.f32 %v1495, %v983
  %v1528 = vmul.f32 %v1496, %v984
  %v1529 = vmul.f32 %v1497, %v985
  %v1530 = vmul.f32 %v1498, 1.442695
  %v1531 = vpow.pop %v1530
  %v1532 = vmul.f32 %v1499, 1.442695
  %v1533 = vpow.pop %v1532
  %v1534 = vmul.f32 %v1500, 1.442695
  %v1535 = vpow.pop %v1534
  %v1536 = vmul.f32 %v1501, 1.442695
  %v1537 = vpow.pop %v1536
  %v1538 = vmul.f32 %v1502, 1.442695
  %v1539 = vpow.pop %v1538
  %v1540 = vmul.f32 %v1503, 1.442695
  %v1541 = vpow.pop %v1540
  %v1542 = vmul.f32 %v1504, 1.442695
  %v1543 = vpow.pop %v1542
  %v1544 = vmul.f32 %v1505, 1.442695
  %v1545 = vpow.pop %v1544
  %v1546 = vmul.f32 %v1506, 1.442695
  %v1547 = vpow.pop %v1546
  %v1548 = vmul.f32 %v1507, 1.442695
  %v1549 = vpow.pop %v1548
  %v1550 = vmul.f32 %v1508, 1.442695
  %v1551 = vpow.pop %v1550
  %v1552 = vmul.f32 %v1509, 1.442695
  %v1553 = vpow.pop %v1552
  %v1554 = vmul.f32 %v1510, 1.442695
  %v1555 = vpow.pop %v1554
  %v1556 = vmul.f32 %v1511, 1.442695
  %v1557 = vpow.pop %v1556
  %v1558 = vmul.f32 %v1512, 1.442695
  %v1559 = vpow.pop %v1558
  %v1560 = vmul.f32 %v1513, 1.442695
  %v1561 = vpow.pop %v1560
  %v1562 = vmul.f32 %v1514, 1.442695
  %v1563 = vpow.pop %v1562
  %v1564 = vmul.f32 %v1515, 1.442695
  %v1565 = vpow.pop %v1564
  %v1566 = vmul.f32 %v1516, 1.442695
  %v1567 = vpow.pop %v1566
  %v1568 = vmul.f32 %v1517, 1.442695
  %v1569 = vpow.pop %v1568
  %v1570 = vmul.f32 %v1518, 1.442695
  %v1571 = vpow.pop %v1570
  %v1572 = vmul.f32 %v1519, 1.442695
  %v1573 = vpow.pop %v1572
  %v1574 = vmul.f32 %v1520, 1.442695
  %v1575 = vpow.pop %v1574
  %v1576 = vmul.f32 %v1521, 1.442695
  %v1577 = vpow.pop %v1576
  %v1578 = vmul.f32 %v1522, 1.442695
  %v1579 = vpow.pop %v1578
  %v1580 = vmul.f32 %v1523, 1.442695
  %v1581 = vpow.pop %v1580
  %v1582 = vmul.f32 %v1524, 1.442695
  %v1583 = vpow.pop %v1582
  %v1584 = vmul.f32 %v1525, 1.442695
  %v1585 = vpow.pop %v1584
  %v1586 = vmul.f32 %v1526, 1.442695
  %v1587 = vpow.pop %v1586
  %v1588 = vmul.f32 %v1527, 1.442695
  %v1589 = vpow.pop %v1588
  %v1590 = vmul.f32 %v1528, 1.442695
  %v1591 = vpow.pop %v1590
  %v1592 = vmul.f32 %v1529, 1.442695
  %v1593 = vpow.pop %v1592
  %v1594 = vmul.f32 %v1434, %v1531
  %v1595 = vmul.f32 %v1435, %v1533
  %v1596 = vmul.f32 %v1436, %v1535
  %v1597 = vmul.f32 %v1437, %v1537
  %v1598 = vmul.f32 %v1438, %v1539
  %v1599 = vmul.f32 %v1439, %v1541
  %v1600 = vmul.f32 %v1440, %v1543
  %v1601 = vmul.f32 %v1441, %v1545
  %v1602 = vmul.f32 %v1442, %v1547
  %v1603 = vmul.f32 %v1443, %v1549
  %v1604 = vmul.f32 %v1444, %v1551
  %v1605 = vmul.f32 %v1445, %v1553
  %v1606 = vmul.f32 %v1446, %v1555
  %v1607 = vmul.f32 %v1447, %v1557
  %v1608 = vmul.f32 %v1448, %v1559
  %v1609 = vmul.f32 %v1449, %v1561
  %v1610 = vmul.f32 %v1450, %v1563
  %v1611 = vmul.f32 %v1451, %v1565
  %v1612 = vmul.f32 %v1452, %v1567
  %v1613 = vmul.f32 %v1453, %v1569
  %v1614 = vmul.f32 %v1454, %v1571
  %v1615 = vmul.f32 %v1455, %v1573
  %v1616 = vmul.f32 %v1456, %v1575
  %v1617 = vmul.f32 %v1457, %v1577
  %v1618 = vmul.f32 %v1458, %v1579
  %v1619 = vmul.f32 %v1459, %v1581
  %v1620 = vmul.f32 %v1460, %v1583
  %v1621 = vmul.f32 %v1461, %v1585
  %v1622 = vmul.f32 %v1462, %v1587
  %v1623 = vmul.f32 %v1463, %v1589
  %v1624 = vmul.f32 %v1464, %v1591
  %v1625 = vmul.f32 %v1465, %v1593
  %v1626 = vsub.f32 1.0, %v1594
  %v1627 = vsub.f32 1.0, %v1595
  %v1628 = vsub.f32 1.0, %v1596
  %v1629 = vsub.f32 1.0, %v1597
  %v1630 = vsub.f32 1.0, %v1598
  %v1631 = vsub.f32 1.0, %v1599
  %v1632 = vsub.f32 1.0, %v1600
  %v1633 = vsub.f32 1.0, %v1601
  %v1634 = vsub.f32 1.0, %v1602
  %v1635 = vsub.f32 1.0, %v1603
  %v1636 = vsub.f32 1.0, %v1604
  %v1637 = vsub.f32 1.0, %v1605
  %v1638 = vsub.f32 1.0, %v1606
  %v1639 = vsub.f32 1.0, %v1607
  %v1640 = vsub.f32 1.0, %v1608
  %v1641 = vsub.f32 1.0, %v1609
  %v1642 = vsub.f32 1.0, %v1610
  %v1643 = vsub.f32 1.0, %v1611
  %v1644 = vsub.f32 1.0, %v1612
  %v1645 = vsub.f32 1.0, %v1613
  %v1646 = vsub.f32 1.0, %v1614
  %v1647 = vsub.f32 1.0, %v1615
  %v1648 = vsub.f32 1.0, %v1616
  %v1649 = vsub.f32 1.0, %v1617
  %v1650 = vsub.f32 1.0, %v1618
  %v1651 = vsub.f32 1.0, %v1619
  %v1652 = vsub.f32 1.0, %v1620
  %v1653 = vsub.f32 1.0, %v1621
  %v1654 = vsub.f32 1.0, %v1622
  %v1655 = vsub.f32 1.0, %v1623
  %v1656 = vsub.f32 1.0, %v1624
  %v1657 = vsub.f32 1.0, %v1625
  %vm1658 = vcmp.ge.f32.partialorder %v922, 0.0
  %vm1659 = vcmp.ge.f32.partialorder %v923, 0.0
  %vm1660 = vcmp.ge.f32.partialorder %v924, 0.0
  %vm1661 = vcmp.ge.f32.partialorder %v925, 0.0
  %vm1662 = vcmp.ge.f32.partialorder %v926, 0.0
  %vm1663 = vcmp.ge.f32.partialorder %v927, 0.0
  %vm1664 = vcmp.ge.f32.partialorder %v928, 0.0
  %vm1665 = vcmp.ge.f32.partialorder %v929, 0.0
  %vm1666 = vcmp.ge.f32.partialorder %v930, 0.0
  %vm1667 = vcmp.ge.f32.partialorder %v931, 0.0
  %vm1668 = vcmp.ge.f32.partialorder %v932, 0.0
  %vm1669 = vcmp.ge.f32.partialorder %v933, 0.0
  %vm1670 = vcmp.ge.f32.partialorder %v934, 0.0
  %vm1671 = vcmp.ge.f32.partialorder %v935, 0.0
  %vm1672 = vcmp.ge.f32.partialorder %v936, 0.0
  %vm1673 = vcmp.ge.f32.partialorder %v937, 0.0
  %vm1674 = vcmp.ge.f32.partialorder %v938, 0.0
  %vm1675 = vcmp.ge.f32.partialorder %v939, 0.0
  %vm1676 = vcmp.ge.f32.partialorder %v940, 0.0
  %vm1677 = vcmp.ge.f32.partialorder %v941, 0.0
  %vm1678 = vcmp.ge.f32.partialorder %v942, 0.0
  %vm1679 = vcmp.ge.f32.partialorder %v943, 0.0
  %vm1680 = vcmp.ge.f32.partialorder %v944, 0.0
  %vm1681 = vcmp.ge.f32.partialorder %v945, 0.0
  %vm1682 = vcmp.ge.f32.partialorder %v946, 0.0
  %vm1683 = vcmp.ge.f32.partialorder %v947, 0.0
  %vm1684 = vcmp.ge.f32.partialorder %v948, 0.0
  %vm1685 = vcmp.ge.f32.partialorder %v949, 0.0
  %vm1686 = vcmp.ge.f32.partialorder %v950, 0.0
  %vm1687 = vcmp.ge.f32.partialorder %v951, 0.0
  %vm1688 = vcmp.ge.f32.partialorder %v952, 0.0
  %vm1689 = vcmp.ge.f32.partialorder %v953, 0.0
  %v1690 = vsub.f32 0.0, %v1626
  %v1691 = vsub.f32 0.0, %v1627
  %v1692 = vsub.f32 0.0, %v1628
  %v1693 = vsub.f32 0.0, %v1629
  %v1694 = vsub.f32 0.0, %v1630
  %v1695 = vsub.f32 0.0, %v1631
  %v1696 = vsub.f32 0.0, %v1632
  %v1697 = vsub.f32 0.0, %v1633
  %v1698 = vsub.f32 0.0, %v1634
  %v1699 = vsub.f32 0.0, %v1635
  %v1700 = vsub.f32 0.0, %v1636
  %v1701 = vsub.f32 0.0, %v1637
  %v1702 = vsub.f32 0.0, %v1638
  %v1703 = vsub.f32 0.0, %v1639
  %v1704 = vsub.f32 0.0, %v1640
  %v1705 = vsub.f32 0.0, %v1641
  %v1706 = vsub.f32 0.0, %v1642
  %v1707 = vsub.f32 0.0, %v1643
  %v1708 = vsub.f32 0.0, %v1644
  %v1709 = vsub.f32 0.0, %v1645
  %v1710 = vsub.f32 0.0, %v1646
  %v1711 = vsub.f32 0.0, %v1647
  %v1712 = vsub.f32 0.0, %v1648
  %v1713 = vsub.f32 0.0, %v1649
  %v1714 = vsub.f32 0.0, %v1650
  %v1715 = vsub.f32 0.0, %v1651
  %v1716 = vsub.f32 0.0, %v1652
  %v1717 = vsub.f32 0.0, %v1653
  %v1718 = vsub.f32 0.0, %v1654
  %v1719 = vsub.f32 0.0, %v1655
  %v1720 = vsub.f32 0.0, %v1656
  %v1721 = vsub.f32 0.0, %v1657
  %v1722 = vsel %vm1658, %v1626, %v1690
  %v1723 = vsel %vm1659, %v1627, %v1691
  %v1724 = vsel %vm1660, %v1628, %v1692
  %v1725 = vsel %vm1661, %v1629, %v1693
  %v1726 = vsel %vm1662, %v1630, %v1694
  %v1727 = vsel %vm1663, %v1631, %v1695
  %v1728 = vsel %vm1664, %v1632, %v1696
  %v1729 = vsel %vm1665, %v1633, %v1697
  %v1730 = vsel %vm1666, %v1634, %v1698
  %v1731 = vsel %vm1667, %v1635, %v1699
  %v1732 = vsel %vm1668, %v1636, %v1700
  %v1733 = vsel %vm1669, %v1637, %v1701
  %v1734 = vsel %vm1670, %v1638, %v1702
  %v1735 = vsel %vm1671, %v1639, %v1703
  %v1736 = vsel %vm1672, %v1640, %v1704
  %v1737 = vsel %vm1673, %v1641, %v1705
  %v1738 = vsel %vm1674, %v1642, %v1706
  %v1739 = vsel %vm1675, %v1643, %v1707
  %v1740 = vsel %vm1676, %v1644, %v1708
  %v1741 = vsel %vm1677, %v1645, %v1709
  %v1742 = vsel %vm1678, %v1646, %v1710
  %v1743 = vsel %vm1679, %v1647, %v1711
  %v1744 = vsel %vm1680, %v1648, %v1712
  %v1745 = vsel %vm1681, %v1649, %v1713
  %v1746 = vsel %vm1682, %v1650, %v1714
  %v1747 = vsel %vm1683, %v1651, %v1715
  %v1748 = vsel %vm1684, %v1652, %v1716
  %v1749 = vsel %vm1685, %v1653, %v1717
  %v1750 = vsel %vm1686, %v1654, %v1718
  %v1751 = vsel %vm1687, %v1655, %v1719
  %v1752 = vsel %vm1688, %v1656, %v1720
  %v1753 = vsel %vm1689, %v1657, %v1721
  %v1754 = vmul.f32 %v1722, 0.5
  %v1755 = vmul.f32 %v1723, 0.5
  %v1756 = vmul.f32 %v1724, 0.5
  %v1757 = vmul.f32 %v1725, 0.5
  %v1758 = vmul.f32 %v1726, 0.5
  %v1759 = vmul.f32 %v1727, 0.5
  %v1760 = vmul.f32 %v1728, 0.5
  %v1761 = vmul.f32 %v1729, 0.5
  %v1762 = vmul.f32 %v1730, 0.5
  %v1763 = vmul.f32 %v1731, 0.5
  %v1764 = vmul.f32 %v1732, 0.5
  %v1765 = vmul.f32 %v1733, 0.5
  %v1766 = vmul.f32 %v1734, 0.5
  %v1767 = vmul.f32 %v1735, 0.5
  %v1768 = vmul.f32 %v1736, 0.5
  %v1769 = vmul.f32 %v1737, 0.5
  %v1770 = vmul.f32 %v1738, 0.5
  %v1771 = vmul.f32 %v1739, 0.5
  %v1772 = vmul.f32 %v1740, 0.5
  %v1773 = vmul.f32 %v1741, 0.5
  %v1774 = vmul.f32 %v1742, 0.5
  %v1775 = vmul.f32 %v1743, 0.5
  %v1776 = vmul.f32 %v1744, 0.5
  %v1777 = vmul.f32 %v1745, 0.5
  %v1778 = vmul.f32 %v1746, 0.5
  %v1779 = vmul.f32 %v1747, 0.5
  %v1780 = vmul.f32 %v1748, 0.5
  %v1781 = vmul.f32 %v1749, 0.5
  %v1782 = vmul.f32 %v1750, 0.5
  %v1783 = vmul.f32 %v1751, 0.5
  %v1784 = vmul.f32 %v1752, 0.5
  %v1785 = vmul.f32 %v1753, 0.5
  %v1786 = vadd.f32 %v1754, 0.5
  %v1787 = vadd.f32 %v1755, 0.5
  %v1788 = vadd.f32 %v1756, 0.5
  %v1789 = vadd.f32 %v1757, 0.5
  %v1790 = vadd.f32 %v1758, 0.5
  %v1791 = vadd.f32 %v1759, 0.5
  %v1792 = vadd.f32 %v1760, 0.5
  %v1793 = vadd.f32 %v1761, 0.5
  %v1794 = vadd.f32 %v1762, 0.5
  %v1795 = vadd.f32 %v1763, 0.5
  %v1796 = vadd.f32 %v1764, 0.5
  %v1797 = vadd.f32 %v1765, 0.5
  %v1798 = vadd.f32 %v1766, 0.5
  %v1799 = vadd.f32 %v1767, 0.5
  %v1800 = vadd.f32 %v1768, 0.5
  %v1801 = vadd.f32 %v1769, 0.5
  %v1802 = vadd.f32 %v1770, 0.5
  %v1803 = vadd.f32 %v1771, 0.5
  %v1804 = vadd.f32 %v1772, 0.5
  %v1805 = vadd.f32 %v1773, 0.5
  %v1806 = vadd.f32 %v1774, 0.5
  %v1807 = vadd.f32 %v1775, 0.5
  %v1808 = vadd.f32 %v1776, 0.5
  %v1809 = vadd.f32 %v1777, 0.5
  %v1810 = vadd.f32 %v1778, 0.5
  %v1811 = vadd.f32 %v1779, 0.5
  %v1812 = vadd.f32 %v1780, 0.5
  %v1813 = vadd.f32 %v1781, 0.5
  %v1814 = vadd.f32 %v1782, 0.5
  %v1815 = vadd.f32 %v1783, 0.5
  %v1816 = vadd.f32 %v1784, 0.5
  %v1817 = vadd.f32 %v1785, 0.5
  %v1818 = vmul.f32 %v890, %v1786
  %v1819 = vmul.f32 %v891, %v1787
  %v1820 = vmul.f32 %v892, %v1788
  %v1821 = vmul.f32 %v893, %v1789
  %v1822 = vmul.f32 %v894, %v1790
  %v1823 = vmul.f32 %v895, %v1791
  %v1824 = vmul.f32 %v896, %v1792
  %v1825 = vmul.f32 %v897, %v1793
  %v1826 = vmul.f32 %v898, %v1794
  %v1827 = vmul.f32 %v899, %v1795
  %v1828 = vmul.f32 %v900, %v1796
  %v1829 = vmul.f32 %v901, %v1797
  %v1830 = vmul.f32 %v902, %v1798
  %v1831 = vmul.f32 %v903, %v1799
  %v1832 = vmul.f32 %v904, %v1800
  %v1833 = vmul.f32 %v905, %v1801
  %v1834 = vmul.f32 %v906, %v1802
  %v1835 = vmul.f32 %v907, %v1803
  %v1836 = vmul.f32 %v908, %v1804
  %v1837 = vmul.f32 %v909, %v1805
  %v1838 = vmul.f32 %v910, %v1806
  %v1839 = vmul.f32 %v911, %v1807
  %v1840 = vmul.f32 %v912, %v1808
  %v1841 = vmul.f32 %v913, %v1809
  %v1842 = vmul.f32 %v914, %v1810
  %v1843 = vmul.f32 %v915, %v1811
  %v1844 = vmul.f32 %v916, %v1812
  %v1845 = vmul.f32 %v917, %v1813
  %v1846 = vmul.f32 %v918, %v1814
  %v1847 = vmul.f32 %v919, %v1815
  %v1848 = vmul.f32 %v920, %v1816
  %v1849 = vmul.f32 %v921, %v1817
  %v1850 = vadd.f32 %v1818, %v1820
  %v1851 = vadd.f32 %v1850, %v1822
  %v1852 = vadd.f32 %v1851, %v1824
  %v1853 = vadd.f32 %v1852, %v1826
  %v1854 = vadd.f32 %v1853, %v1828
  %v1855 = vadd.f32 %v1854, %v1830
  %v1856 = vadd.f32 %v1855, %v1832
  %v1857 = vadd.f32 %v1856, %v1834
  %v1858 = vadd.f32 %v1857, %v1836
  %v1859 = vadd.f32 %v1858, %v1838
  %v1860 = vadd.f32 %v1859, %v1840
  %v1861 = vadd.f32 %v1860, %v1842
  %v1862 = vadd.f32 %v1861, %v1844
  %v1863 = vadd.f32 %v1862, %v1846
  %v1864 = vadd.f32 %v1863, %v1848
  %v1865 = vadd.f32 %v1819, %v1821
  %v1866 = vadd.f32 %v1865, %v1823
  %v1867 = vadd.f32 %v1866, %v1825
  %v1868 = vadd.f32 %v1867, %v1827
  %v1869 = vadd.f32 %v1868, %v1829
  %v1870 = vadd.f32 %v1869, %v1831
  %v1871 = vadd.f32 %v1870, %v1833
  %v1872 = vadd.f32 %v1871, %v1835
  %v1873 = vadd.f32 %v1872, %v1837
  %v1874 = vadd.f32 %v1873, %v1839
  %v1875 = vadd.f32 %v1874, %v1841
  %v1876 = vadd.f32 %v1875, %v1843
  %v1877 = vadd.f32 %v1876, %v1845
  %v1878 = vadd.f32 %v1877, %v1847
  %v1879 = vadd.f32 %v1878, %v1849
  %v1880 = vadd.f32 %v1864, %v1879
  %v1881 = vrot.slane %v1880, 4
  %v1882 = vadd.f32 %v1880, %v1881
  %v1883 = vrot.slane %v1882, 2
  %v1884 = vadd.f32 %v1882, %v1883
  %v1885 = vrot.slane %v1884, 1
  %v1886 = vadd.f32 %v1884, %v1885
  %v1887 = vmul.f32 %v1886, 0.00390625
  %v1888 = vsub.f32 %v1818, %v1887
  %v1889 = vsub.f32 %v1819, %v1887
  %v1890 = vsub.f32 %v1820, %v1887
  %v1891 = vsub.f32 %v1821, %v1887
  %v1892 = vsub.f32 %v1822, %v1887
  %v1893 = vsub.f32 %v1823, %v1887
  %v1894 = vsub.f32 %v1824, %v1887
  %v1895 = vsub.f32 %v1825, %v1887
  %v1896 = vsub.f32 %v1826, %v1887
  %v1897 = vsub.f32 %v1827, %v1887
  %v1898 = vsub.f32 %v1828, %v1887
  %v1899 = vsub.f32 %v1829, %v1887
  %v1900 = vsub.f32 %v1830, %v1887
  %v1901 = vsub.f32 %v1831, %v1887
  %v1902 = vsub.f32 %v1832, %v1887
  %v1903 = vsub.f32 %v1833, %v1887
  %v1904 = vsub.f32 %v1834, %v1887
  %v1905 = vsub.f32 %v1835, %v1887
  %v1906 = vsub.f32 %v1836, %v1887
  %v1907 = vsub.f32 %v1837, %v1887
  %v1908 = vsub.f32 %v1838, %v1887
  %v1909 = vsub.f32 %v1839, %v1887
  %v1910 = vsub.f32 %v1840, %v1887
  %v1911 = vsub.f32 %v1841, %v1887
  %v1912 = vsub.f32 %v1842, %v1887
  %v1913 = vsub.f32 %v1843, %v1887
  %v1914 = vsub.f32 %v1844, %v1887
  %v1915 = vsub.f32 %v1845, %v1887
  %v1916 = vsub.f32 %v1846, %v1887
  %v1917 = vsub.f32 %v1847, %v1887
  %v1918 = vsub.f32 %v1848, %v1887
  %v1919 = vsub.f32 %v1849, %v1887
  %v1920 = vmul.f32 %v1888, %v1888
  %v1921 = vmul.f32 %v1889, %v1889
  %v1922 = vmul.f32 %v1890, %v1890
  %v1923 = vmul.f32 %v1891, %v1891
  %v1924 = vmul.f32 %v1892, %v1892
  %v1925 = vmul.f32 %v1893, %v1893
  %v1926 = vmul.f32 %v1894, %v1894
  %v1927 = vmul.f32 %v1895, %v1895
  %v1928 = vmul.f32 %v1896, %v1896
  %v1929 = vmul.f32 %v1897, %v1897
  %v1930 = vmul.f32 %v1898, %v1898
  %v1931 = vmul.f32 %v1899, %v1899
  %v1932 = vmul.f32 %v1900, %v1900
  %v1933 = vmul.f32 %v1901, %v1901
  %v1934 = vmul.f32 %v1902, %v1902
  %v1935 = vmul.f32 %v1903, %v1903
  %v1936 = vmul.f32 %v1904, %v1904
  %v1937 = vmul.f32 %v1905, %v1905
  %v1938 = vmul.f32 %v1906, %v1906
  %v1939 = vmul.f32 %v1907, %v1907
  %v1940 = vmul.f32 %v1908, %v1908
  %v1941 = vmul.f32 %v1909, %v1909
  %v1942 = vmul.f32 %v1910, %v1910
  %v1943 = vmul.f32 %v1911, %v1911
  %v1944 = vmul.f32 %v1912, %v1912
  %v1945 = vmul.f32 %v1913, %v1913
  %v1946 = vmul.f32 %v1914, %v1914
  %v1947 = vmul.f32 %v1915, %v1915
  %v1948 = vmul.f32 %v1916, %v1916
  %v1949 = vmul.f32 %v1917, %v1917
  %v1950 = vmul.f32 %v1918, %v1918
  %v1951 = vmul.f32 %v1919, %v1919
  %v1952 = vadd.f32 %v1920, %v1922
  %v1953 = vadd.f32 %v1952, %v1924
  %v1954 = vadd.f32 %v1953, %v1926
  %v1955 = vadd.f32 %v1954, %v1928
  %v1956 = vadd.f32 %v1955, %v1930
  %v1957 = vadd.f32 %v1956, %v1932
  %v1958 = vadd.f32 %v1957, %v1934
  %v1959 = vadd.f32 %v1958, %v1936
  %v1960 = vadd.f32 %v1959, %v1938
  %v1961 = vadd.f32 %v1960, %v1940
  %v1962 = vadd.f32 %v1961, %v1942
  %v1963 = vadd.f32 %v1962, %v1944
  %v1964 = vadd.f32 %v1963, %v1946
  %v1965 = vadd.f32 %v1964, %v1948
  %v1966 = vadd.f32 %v1965, %v1950
  %v1967 = vadd.f32 %v1921, %v1923
  %v1968 = vadd.f32 %v1967, %v1925
  %v1969 = vadd.f32 %v1968, %v1927
  %v1970 = vadd.f32 %v1969, %v1929
  %v1971 = vadd.f32 %v1970, %v1931
  %v1972 = vadd.f32 %v1971, %v1933
  %v1973 = vadd.f32 %v1972, %v1935
  %v1974 = vadd.f32 %v1973, %v1937
  %v1975 = vadd.f32 %v1974, %v1939
  %v1976 = vadd.f32 %v1975, %v1941
  %v1977 = vadd.f32 %v1976, %v1943
  %v1978 = vadd.f32 %v1977, %v1945
  %v1979 = vadd.f32 %v1978, %v1947
  %v1980 = vadd.f32 %v1979, %v1949
  %v1981 = vadd.f32 %v1980, %v1951
  %v1982 = vadd.f32 %v1966, %v1981
  %v1983 = vrot.slane %v1982, 4
  %v1984 = vadd.f32 %v1982, %v1983
  %v1985 = vrot.slane %v1984, 2
  %v1986 = vadd.f32 %v1984, %v1985
  %v1987 = vrot.slane %v1986, 1
  %v1988 = vadd.f32 %v1986, %v1987
  %v1989 = vmul.f32 %v1988, 0.00390625
  %v1990 = vadd.f32 %v1989, 1e-05
  %v1991 = vrsqrt.pop %v1990
  %v1992 = vld [vmem:[%s2] sm:$0x1]
  %v1993 = vmul.f32 %v1991, %v1992
  %v1994 = vlaneseq
  %v1995 = vshrl.u32 %v1994, 7
  %v1996 = vsub.s32 0, %v1995
  %v1997 = vrot.slane %v1993, %v1996
  %v1998 = vmul.f32 %v1888, %v1997
  %v1999 = vmul.f32 %v1889, %v1997
  %v2000 = vmul.f32 %v1890, %v1997
  %v2001 = vmul.f32 %v1891, %v1997
  %v2002 = vmul.f32 %v1892, %v1997
  %v2003 = vmul.f32 %v1893, %v1997
  %v2004 = vmul.f32 %v1894, %v1997
  %v2005 = vmul.f32 %v1895, %v1997
  %v2006 = vmul.f32 %v1896, %v1997
  %v2007 = vmul.f32 %v1897, %v1997
  %v2008 = vmul.f32 %v1898, %v1997
  %v2009 = vmul.f32 %v1899, %v1997
  %v2010 = vmul.f32 %v1900, %v1997
  %v2011 = vmul.f32 %v1901, %v1997
  %v2012 = vmul.f32 %v1902, %v1997
  %v2013 = vmul.f32 %v1903, %v1997
  %v2014 = vmul.f32 %v1904, %v1997
  %v2015 = vmul.f32 %v1905, %v1997
  %v2016 = vmul.f32 %v1906, %v1997
  %v2017 = vmul.f32 %v1907, %v1997
  %v2018 = vmul.f32 %v1908, %v1997
  %v2019 = vmul.f32 %v1909, %v1997
  %v2020 = vmul.f32 %v1910, %v1997
  %v2021 = vmul.f32 %v1911, %v1997
  %v2022 = vmul.f32 %v1912, %v1997
  %v2023 = vmul.f32 %v1913, %v1997
  %v2024 = vmul.f32 %v1914, %v1997
  %v2025 = vmul.f32 %v1915, %v1997
  %v2026 = vmul.f32 %v1916, %v1997
  %v2027 = vmul.f32 %v1917, %v1997
  %v2028 = vmul.f32 %v1918, %v1997
  %v2029 = vmul.f32 %v1919, %v1997
  %v2030 = vld [vmem:[%s3] sm:$0x1]
  %v2032 = vlaneseq
  %v2033 = vshrl.u32 %v2032, 7
  %v2034 = vsub.s32 0, %v2033
  %v2035 = vrot.slane %v2030, %v2034
  %v2037 = vadd.f32 %v1998, %v2035
  %v2038 = vadd.f32 %v1999, %v2035
  %v2039 = vadd.f32 %v2000, %v2035
  %v2040 = vadd.f32 %v2001, %v2035
  %v2041 = vadd.f32 %v2002, %v2035
  %v2042 = vadd.f32 %v2003, %v2035
  %v2043 = vadd.f32 %v2004, %v2035
  %v2044 = vadd.f32 %v2005, %v2035
  %v2045 = vadd.f32 %v2006, %v2035
  %v2046 = vadd.f32 %v2007, %v2035
  %v2047 = vadd.f32 %v2008, %v2035
  %v2048 = vadd.f32 %v2009, %v2035
  %v2049 = vadd.f32 %v2010, %v2035
  %v2050 = vadd.f32 %v2011, %v2035
  %v2051 = vadd.f32 %v2012, %v2035
  %v2052 = vadd.f32 %v2013, %v2035
  %v2053 = vadd.f32 %v2014, %v2035
  %v2054 = vadd.f32 %v2015, %v2035
  %v2055 = vadd.f32 %v2016, %v2035
  %v2056 = vadd.f32 %v2017, %v2035
  %v2057 = vadd.f32 %v2018, %v2035
  %v2058 = vadd.f32 %v2019, %v2035
  %v2059 = vadd.f32 %v2020, %v2035
  %v2060 = vadd.f32 %v2021, %v2035
  %v2061 = vadd.f32 %v2022, %v2035
  %v2062 = vadd.f32 %v2023, %v2035
  %v2063 = vadd.f32 %v2024, %v2035
  %v2064 = vadd.f32 %v2025, %v2035
  %v2065 = vadd.f32 %v2026, %v2035
  %v2066 = vadd.f32 %v2027, %v2035
  %v2067 = vadd.f32 %v2028, %v2035
  %v2068 = vadd.f32 %v2029, %v2035
  %2069 = vst [vmem:[%s5] sm:$0xff] %v2037
  %2070 = vst [vmem:[%s5 + $0x8] sm:$0xff] %v2038
  %2071 = vst [vmem:[%s5 + $0x10] sm:$0xff] %v2039
  %2072 = vst [vmem:[%s5 + $0x18] sm:$0xff] %v2040
  %2073 = vst [vmem:[%s5 + $0x20] sm:$0xff] %v2041
  %2074 = vst [vmem:[%s5 + $0x28] sm:$0xff] %v2042
  %2075 = vst [vmem:[%s5 + $0x30] sm:$0xff] %v2043
  %2076 = vst [vmem:[%s5 + $0x38] sm:$0xff] %v2044
  %2077 = vst [vmem:[%s5 + $0x40] sm:$0xff] %v2045
  %2078 = vst [vmem:[%s5 + $0x48] sm:$0xff] %v2046
  %2079 = vst [vmem:[%s5 + $0x50] sm:$0xff] %v2047
  %2080 = vst [vmem:[%s5 + $0x58] sm:$0xff] %v2048
  %2081 = vst [vmem:[%s5 + $0x60] sm:$0xff] %v2049
  %2082 = vst [vmem:[%s5 + $0x68] sm:$0xff] %v2050
  %2083 = vst [vmem:[%s5 + $0x70] sm:$0xff] %v2051
  %2084 = vst [vmem:[%s5 + $0x78] sm:$0xff] %v2052
  %2085 = vst [vmem:[%s5 + $0x80] sm:$0xff] %v2053
  %2086 = vst [vmem:[%s5 + $0x88] sm:$0xff] %v2054
  %2087 = vst [vmem:[%s5 + $0x90] sm:$0xff] %v2055
  %2088 = vst [vmem:[%s5 + $0x98] sm:$0xff] %v2056
  %2089 = vst [vmem:[%s5 + $0xa0] sm:$0xff] %v2057
  %2090 = vst [vmem:[%s5 + $0xa8] sm:$0xff] %v2058
  %2091 = vst [vmem:[%s5 + $0xb0] sm:$0xff] %v2059
  %2092 = vst [vmem:[%s5 + $0xb8] sm:$0xff] %v2060
  %2093 = vst [vmem:[%s5 + $0xc0] sm:$0xff] %v2061
  %2094 = vst [vmem:[%s5 + $0xc8] sm:$0xff] %v2062
  %2095 = vst [vmem:[%s5 + $0xd0] sm:$0xff] %v2063
  %2096 = vst [vmem:[%s5 + $0xd8] sm:$0xff] %v2064
  %2097 = vst [vmem:[%s5 + $0xe0] sm:$0xff] %v2065
  %2098 = vst [vmem:[%s5 + $0xe8] sm:$0xff] %v2066
  %2099 = vst [vmem:[%s5 + $0xf0] sm:$0xff] %v2067
  %2100 = vst [vmem:[%s5 + $0xf8] sm:$0xff] %v2068
  // Predicated region
  $region22: #{bandwise_conv.1} parent=0 // pred_check
    _
  $region23: #{bandwise_conv.1} parent=0 // pred_check_branch
    %2102 = sbr.rel (0) target = $region25
  $region24: #{bandwise_conv.1} parent=0 // pred_region
    _
  $region25: #{bandwise_conv.1} parent=0 // pred_fallthru
    _
  // Predicated region
  $region26: #{bandwise_conv.1} parent=0 // pred_check
    _
  $region27: #{bandwise_conv.1} parent=0 // pred_check_branch
    %2104 = sbr.rel (0) target = $region29
  $region28: #{bandwise_conv.1} parent=0 // pred_region
    _
  $region29: #{bandwise_conv.1} parent=0 // pred_fallthru
    _

</llo_original>
